<compile_context>
chip_gen: v5e
topology: v5e:2x2
jax: 0.10.0
libtpu: 0.0.40
codegen_flags: <defaults>
</compile_context>

<pallas_src>
import jax
import jax.numpy as jnp
from jax import lax
from jax.experimental import pallas as pl
from jax.experimental.pallas import tpu as pltpu

# ---------------- model config (small synthetic BERT) ----------------
B, S = 2, 8            # batch, sequence length
H, NH, DH = 32, 2, 16  # hidden, num heads, head dim
FF = 64                # feed-forward width
LAYERS = 2
VOCAB = 50
MAX_POS = 16
TYPE_VOCAB = 2
NUM_CLASSES = 4
EPS = 1e-12


def _gelu(x):
    # tanh-approx GELU (EUP-friendly)
    return 0.5 * x * (1.0 + jnp.tanh(0.7978845608028654 * (x + 0.044715 * x * x * x)))


def _ln(x, g, b):
    mu = jnp.mean(x, axis=-1, keepdims=True)
    xc = x - mu
    var = jnp.mean(xc * xc, axis=-1, keepdims=True)
    return xc * lax.rsqrt(var + EPS) * g + b


# ---------------- fused Pallas kernel (whole encoder + RE head) ----------------
def _bert_re_kernel(
    idx_ref,                                  # SMEM scalar prefetch: [B, 2] int32
    x_ref,                                    # [B*S, H] summed embeddings (pre-LN)
    mask_ref,                                 # [B, S] additive attention bias
    eg_ref, eb_ref,                           # embedding LN gamma/beta [1, H]
    wqkv_ref, bqkv_ref,                       # [L, H, 3H], [L, 1, 3H] (scale folded into Q)
    wo_ref, bo_ref,                           # [L, H, H],  [L, 1, H]
    ln1g_ref, ln1b_ref,                       # [L, 1, H]
    wi_ref, bi_ref,                           # [L, H, FF], [L, 1, FF]
    wo2_ref, bo2_ref,                         # [L, FF, H], [L, 1, H]
    ln2g_ref, ln2b_ref,                       # [L, 1, H]
    fcw_ref, fcb_ref,                         # [2H, C], [1, C]
    o_ref,                                    # [B, C] log-softmax output
    h_scr,                                    # VMEM scratch [B*S, H] (for e1/e2 row gather)
):
    mask = mask_ref[...]                                   # [B, S]
    h = _ln(x_ref[...], eg_ref[...], eb_ref[...])          # [B*S, H] f32

    # TODO(synk): on v6e/v7x (and real BERT sizes) cast the dot operands to
    # bfloat16 while keeping f32 accumulation + f32 elementwise; kept f32 here
    # to stay within the 1e-4 validation tolerance at toy scale.
    for l in range(LAYERS):                                # unrolled, LAYERS=2
        # fused QKV projection: one [B*S, H] x [H, 3H] MXU pass
        qkv = jnp.dot(h, wqkv_ref[l], preferred_element_type=jnp.float32) + bqkv_ref[l]

        # per-(batch, head) attention, fully unrolled in VMEM; heads are lane
        # slices of the [B*S, 3H] buffer -> no split_heads transposes.
        ctx_rows = []
        for b in range(B):
            head_outs = []
            bias_b = mask[b:b + 1, :]                      # [1, S] broadcasts over rows
            for hd in range(NH):
                r0, r1 = b * S, (b + 1) * S
                q_bh = qkv[r0:r1, hd * DH:(hd + 1) * DH]               # [S, DH] (pre-scaled)
                k_bh = qkv[r0:r1, H + hd * DH:H + (hd + 1) * DH]       # [S, DH]
                v_bh = qkv[r0:r1, 2 * H + hd * DH:2 * H + (hd + 1) * DH]
                s = jnp.dot(q_bh, k_bh.T, preferred_element_type=jnp.float32) + bias_b
                m = jnp.max(s, axis=-1, keepdims=True)
                e = jnp.exp(s - m)
                p = e * pl.reciprocal(jnp.sum(e, axis=-1, keepdims=True))
                head_outs.append(jnp.dot(p, v_bh, preferred_element_type=jnp.float32))
            ctx_rows.append(jnp.concatenate(head_outs, axis=-1))        # [S, H]
        ctx = jnp.concatenate(ctx_rows, axis=0)                         # [B*S, H]

        attn_out = jnp.dot(ctx, wo_ref[l], preferred_element_type=jnp.float32) + bo_ref[l]
        h = _ln(h + attn_out, ln1g_ref[l], ln1b_ref[l])

        ff = _gelu(jnp.dot(h, wi_ref[l], preferred_element_type=jnp.float32) + bi_ref[l])
        ff = jnp.dot(ff, wo2_ref[l], preferred_element_type=jnp.float32) + bo2_ref[l]
        h = _ln(h + ff, ln2g_ref[l], ln2b_ref[l])

    # ---- RE head, fused into the same kernel ----
    # Stage final hidden states in a VMEM scratch ref so the data-dependent
    # e1/e2 row gather can use dynamic sublane slicing on a Ref.
    h_scr[...] = h
    feats = []
    for i in range(B):                                     # unrolled, B=2
        e1 = idx_ref[i, 0]
        e2 = idx_ref[i, 1]
        v1 = h_scr[pl.ds(i * S + e1, 1), :]                # [1, H]
        v2 = h_scr[pl.ds(i * S + e2, 1), :]                # [1, H]
        feats.append(jnp.concatenate([v1, v2], axis=-1))   # [1, 2H]
    feat = jnp.tanh(jnp.concatenate(feats, axis=0))        # [B, 2H]

    logits = jnp.dot(feat, fcw_ref[...], preferred_element_type=jnp.float32) + fcb_ref[...]
    m = jnp.max(logits, axis=-1, keepdims=True)
    lse = m + jnp.log(jnp.sum(jnp.exp(logits - m), axis=-1, keepdims=True))
    o_ref[...] = logits - lse                              # [B, C] log_softmax


# ---------------- parameters ----------------
def init_params(key):
    def nrm(k, shape, std=0.02):
        return std * jax.random.normal(k, shape, dtype=jnp.float32)

    keys = iter(jax.random.split(key, 64))
    xavier_std = (2.0 / (2 * H + NUM_CLASSES)) ** 0.5  # xavier_normal_ for fc
    p = {
        "word_emb": nrm(next(keys), (VOCAB, H)),
        "pos_emb": nrm(next(keys), (MAX_POS, H)),
        "type_emb": nrm(next(keys), (TYPE_VOCAB, H)),
        "emb_ln_g": jnp.ones((H,), jnp.float32),
        "emb_ln_b": jnp.zeros((H,), jnp.float32),
        "fc_w": nrm(next(keys), (2 * H, NUM_CLASSES), std=xavier_std),
        "fc_b": jnp.zeros((NUM_CLASSES,), jnp.float32),  # constant_(bias, 0.0)
        "layers": [],
    }
    for _ in range(LAYERS):
        p["layers"].append({
            "wq": nrm(next(keys), (H, H)), "bq": jnp.zeros((H,), jnp.float32),
            "wk": nrm(next(keys), (H, H)), "bk": jnp.zeros((H,), jnp.float32),
            "wv": nrm(next(keys), (H, H)), "bv": jnp.zeros((H,), jnp.float32),
            "wo": nrm(next(keys), (H, H)), "bo": jnp.zeros((H,), jnp.float32),
            "ln1_g": jnp.ones((H,), jnp.float32), "ln1_b": jnp.zeros((H,), jnp.float32),
            "wi": nrm(next(keys), (H, FF)), "bi": jnp.zeros((FF,), jnp.float32),
            "wo2": nrm(next(keys), (FF, H)), "bo2": jnp.zeros((H,), jnp.float32),
            "ln2_g": jnp.ones((H,), jnp.float32), "ln2_b": jnp.zeros((H,), jnp.float32),
        })
    return p


# ---------------- forward (single fused Pallas call) ----------------
def bert_for_re_forward(params, input_ids, e1_e2_start, token_type_ids, attention_mask):
    # TODO(synk): pretrained-weight loading / resize_token_embeddings / param
    # freezing are training-time concerns with no inference-kernel equivalent.
    # Embedding gathers stay in JAX glue (data-dependent table lookup).
    pos_ids = jnp.arange(S)
    x = (params["word_emb"][input_ids]
         + params["pos_emb"][pos_ids][None, :, :]
         + params["type_emb"][token_type_ids]).reshape(B * S, H)          # [B*S, H]
    mask_add = (1.0 - attention_mask.astype(jnp.float32)) * -1e9          # [B, S]

    # Weight prep (once, outside the kernel): fuse Q|K|V and fold 1/sqrt(DH)
    # into the Q projection (weights AND bias).
    scale = 1.0 / (DH ** 0.5)
    Ls = params["layers"]
    wqkv = jnp.stack([jnp.concatenate([l["wq"] * scale, l["wk"], l["wv"]], axis=1) for l in Ls])
    bqkv = jnp.stack([jnp.concatenate([l["bq"] * scale, l["bk"], l["bv"]])[None, :] for l in Ls])
    wo = jnp.stack([l["wo"] for l in Ls])
    bo = jnp.stack([l["bo"][None, :] for l in Ls])
    ln1g = jnp.stack([l["ln1_g"][None, :] for l in Ls])
    ln1b = jnp.stack([l["ln1_b"][None, :] for l in Ls])
    wi = jnp.stack([l["wi"] for l in Ls])
    bi = jnp.stack([l["bi"][None, :] for l in Ls])
    wo2 = jnp.stack([l["wo2"] for l in Ls])
    bo2 = jnp.stack([l["bo2"][None, :] for l in Ls])
    ln2g = jnp.stack([l["ln2_g"][None, :] for l in Ls])
    ln2b = jnp.stack([l["ln2_b"][None, :] for l in Ls])

    C = NUM_CLASSES
    full = lambda shape: pl.BlockSpec(shape, lambda i, idx: (0,) * len(shape))

    grid_spec = pltpu.PrefetchScalarGridSpec(
        num_scalar_prefetch=1,            # e1_e2_start -> SMEM
        grid=(1,),                        # single grid step: everything stays in VMEM
        in_specs=[
            full((B * S, H)),             # x
            full((B, S)),                 # additive mask
            full((1, H)), full((1, H)),   # emb LN
            full((LAYERS, H, 3 * H)), full((LAYERS, 1, 3 * H)),   # wqkv, bqkv
            full((LAYERS, H, H)), full((LAYERS, 1, H)),           # wo, bo
            full((LAYERS, 1, H)), full((LAYERS, 1, H)),           # ln1 g/b
            full((LAYERS, H, FF)), full((LAYERS, 1, FF)),         # wi, bi
            full((LAYERS, FF, H)), full((LAYERS, 1, H)),          # wo2, bo2
            full((LAYERS, 1, H)), full((LAYERS, 1, H)),           # ln2 g/b
            full((2 * H, C)), full((1, C)),                       # fc
        ],
        out_specs=full((B, C)),
        scratch_shapes=[pltpu.VMEM((B * S, H), jnp.float32)],
    )
    return pl.pallas_call(
        _bert_re_kernel,
        out_shape=jax.ShapeDtypeStruct((B, C), jnp.float32),
        grid_spec=grid_spec,
        compiler_params=pltpu.CompilerParams(dimension_semantics=("arbitrary",)),
    )(e1_e2_start, x, mask_add,
      params["emb_ln_g"].reshape(1, H), params["emb_ln_b"].reshape(1, H),
      wqkv, bqkv, wo, bo, ln1g, ln1b, wi, bi, wo2, bo2, ln2g, ln2b,
      params["fc_w"], params["fc_b"].reshape(1, C))


# ---------------- pure-JAX reference for validation ----------------
def bert_for_re_reference(params, input_ids, e1_e2_start, token_type_ids, attention_mask):
    def ln(x, g, b):
        mu = x.mean(-1, keepdims=True)
        var = ((x - mu) ** 2).mean(-1, keepdims=True)
        return (x - mu) / jnp.sqrt(var + EPS) * g + b

    pos_ids = jnp.arange(S)
    h = ln(params["word_emb"][input_ids] + params["pos_emb"][pos_ids][None]
           + params["type_emb"][token_type_ids],
           params["emb_ln_g"], params["emb_ln_b"])
    mask_add = (1.0 - attention_mask.astype(jnp.float32)) * -1e9
    for lp in params["layers"]:
        q = (h @ lp["wq"] + lp["bq"]).reshape(B, S, NH, DH).transpose(0, 2, 1, 3)
        k = (h @ lp["wk"] + lp["bk"]).reshape(B, S, NH, DH).transpose(0, 2, 1, 3)
        v = (h @ lp["wv"] + lp["bv"]).reshape(B, S, NH, DH).transpose(0, 2, 1, 3)
        s = jnp.einsum("bhqd,bhkd->bhqk", q, k) / (DH ** 0.5) + mask_add[:, None, None, :]
        p = jax.nn.softmax(s, axis=-1)
        ctx = jnp.einsum("bhqk,bhkd->bhqd", p, v).transpose(0, 2, 1, 3).reshape(B, S, H)
        h = ln(h + (ctx @ lp["wo"] + lp["bo"]), lp["ln1_g"], lp["ln1_b"])
        ff = _gelu(h @ lp["wi"] + lp["bi"])
        h = ln(h + (ff @ lp["wo2"] + lp["bo2"]), lp["ln2_g"], lp["ln2_b"])
    feats = []
    for i in range(B):
        a = h[i]
        feats.append(jnp.tanh(jnp.concatenate(
            [a[e1_e2_start[i, 0]], a[e1_e2_start[i, 1]]], axis=0)))
    feats = jnp.stack(feats)
    logits = feats @ params["fc_w"] + params["fc_b"]
    return jax.nn.log_softmax(logits, axis=-1)


if __name__ == "__main__":
    key = jax.random.PRNGKey(0)
    kp, ki, ke = jax.random.split(key, 3)
    params = init_params(kp)

    input_ids = jax.random.randint(ki, (B, S), 0, VOCAB, dtype=jnp.int32)
    token_type_ids = jnp.zeros((B, S), jnp.int32)
    attention_mask = jnp.ones((B, S), jnp.float32).at[1, 6:].set(0.0)  # some padding
    e1_e2_start = jax.random.randint(ke, (B, 2), 0, 6, dtype=jnp.int32)

    out = bert_for_re_forward(params, input_ids, e1_e2_start, token_type_ids, attention_mask)
    out = jax.block_until_ready(out)

    ref = bert_for_re_reference(params, input_ids, e1_e2_start, token_type_ids, attention_mask)
    assert out.shape == (B, NUM_CLASSES)
    max_err = float(jnp.max(jnp.abs(out - ref)))
    assert max_err < 1e-4, f"mismatch vs reference: {max_err}"
    print("KERNEL_OK")
</pallas_src>

<mosaic_0001>
module attributes {stable_mosaic.version = 11 : i64} {
  func.func @_bert_re_kernel(%arg0: i32, %arg1: memref<2x2xi32, #tpu.memory_space<smem>>, %arg2: memref<16x32xf32, #tpu.memory_space<vmem>>, %arg3: memref<2x8xf32, #tpu.memory_space<vmem>>, %arg4: memref<1x32xf32, #tpu.memory_space<vmem>>, %arg5: memref<1x32xf32, #tpu.memory_space<vmem>>, %arg6: memref<2x32x96xf32, #tpu.memory_space<vmem>>, %arg7: memref<2x1x96xf32, #tpu.memory_space<vmem>>, %arg8: memref<2x32x32xf32, #tpu.memory_space<vmem>>, %arg9: memref<2x1x32xf32, #tpu.memory_space<vmem>>, %arg10: memref<2x1x32xf32, #tpu.memory_space<vmem>>, %arg11: memref<2x1x32xf32, #tpu.memory_space<vmem>>, %arg12: memref<2x32x64xf32, #tpu.memory_space<vmem>>, %arg13: memref<2x1x64xf32, #tpu.memory_space<vmem>>, %arg14: memref<2x64x32xf32, #tpu.memory_space<vmem>>, %arg15: memref<2x1x32xf32, #tpu.memory_space<vmem>>, %arg16: memref<2x1x32xf32, #tpu.memory_space<vmem>>, %arg17: memref<2x1x32xf32, #tpu.memory_space<vmem>>, %arg18: memref<64x4xf32, #tpu.memory_space<vmem>>, %arg19: memref<1x4xf32, #tpu.memory_space<vmem>>, %arg20: memref<2x4xf32, #tpu.memory_space<vmem>>, %arg21: memref<16x32xf32, #tpu.memory_space<vmem>>) attributes {dimension_semantics = [#tpu.dimension_semantics<arbitrary>], iteration_bounds = array<i64: 1>, scalar_prefetch = 1 : i64, scratch_operands = 1 : i64, tpu.core_type = #tpu.core_type<tc>, window_params = [{pipeline_mode = #tpu.pipeline_mode<synchronous>, transform_indices = @transform_0, window_bounds = array<i64: 16, 32>}, {pipeline_mode = #tpu.pipeline_mode<synchronous>, transform_indices = @transform_1, window_bounds = array<i64: 2, 8>}, {pipeline_mode = #tpu.pipeline_mode<synchronous>, transform_indices = @transform_2, window_bounds = array<i64: 1, 32>}, {pipeline_mode = #tpu.pipeline_mode<synchronous>, transform_indices = @transform_3, window_bounds = array<i64: 1, 32>}, {pipeline_mode = #tpu.pipeline_mode<synchronous>, transform_indices = @transform_4, window_bounds = array<i64: 2, 32, 96>}, {pipeline_mode = #tpu.pipeline_mode<synchronous>, transform_indices = @transform_5, window_bounds = array<i64: 2, 1, 96>}, {pipeline_mode = #tpu.pipeline_mode<synchronous>, transform_indices = @transform_6, window_bounds = array<i64: 2, 32, 32>}, {pipeline_mode = #tpu.pipeline_mode<synchronous>, transform_indices = @transform_7, window_bounds = array<i64: 2, 1, 32>}, {pipeline_mode = #tpu.pipeline_mode<synchronous>, transform_indices = @transform_8, window_bounds = array<i64: 2, 1, 32>}, {pipeline_mode = #tpu.pipeline_mode<synchronous>, transform_indices = @transform_9, window_bounds = array<i64: 2, 1, 32>}, {pipeline_mode = #tpu.pipeline_mode<synchronous>, transform_indices = @transform_10, window_bounds = array<i64: 2, 32, 64>}, {pipeline_mode = #tpu.pipeline_mode<synchronous>, transform_indices = @transform_11, window_bounds = array<i64: 2, 1, 64>}, {pipeline_mode = #tpu.pipeline_mode<synchronous>, transform_indices = @transform_12, window_bounds = array<i64: 2, 64, 32>}, {pipeline_mode = #tpu.pipeline_mode<synchronous>, transform_indices = @transform_13, window_bounds = array<i64: 2, 1, 32>}, {pipeline_mode = #tpu.pipeline_mode<synchronous>, transform_indices = @transform_14, window_bounds = array<i64: 2, 1, 32>}, {pipeline_mode = #tpu.pipeline_mode<synchronous>, transform_indices = @transform_15, window_bounds = array<i64: 2, 1, 32>}, {pipeline_mode = #tpu.pipeline_mode<synchronous>, transform_indices = @transform_16, window_bounds = array<i64: 64, 4>}, {pipeline_mode = #tpu.pipeline_mode<synchronous>, transform_indices = @transform_17, window_bounds = array<i64: 1, 4>}, {pipeline_mode = #tpu.pipeline_mode<synchronous>, transform_indices = @transform_18, window_bounds = array<i64: 2, 4>}]} {
    %c0 = arith.constant 0 : index
    %c0_0 = arith.constant 0 : index
    %0 = vector.load %arg3[%c0, %c0_0] : memref<2x8xf32, #tpu.memory_space<vmem>>, vector<2x8xf32>
    %c0_1 = arith.constant 0 : index
    %c0_2 = arith.constant 0 : index
    %1 = vector.load %arg2[%c0_1, %c0_2] : memref<16x32xf32, #tpu.memory_space<vmem>>, vector<16x32xf32>
    %c0_3 = arith.constant 0 : index
    %c0_4 = arith.constant 0 : index
    %2 = vector.load %arg4[%c0_3, %c0_4] : memref<1x32xf32, #tpu.memory_space<vmem>>, vector<1x32xf32>
    %c0_5 = arith.constant 0 : index
    %c0_6 = arith.constant 0 : index
    %3 = vector.load %arg5[%c0_5, %c0_6] : memref<1x32xf32, #tpu.memory_space<vmem>>, vector<1x32xf32>
    %cst = arith.constant dense<0.000000e+00> : vector<16xf32>
    %4 = vector.multi_reduction <add>, %1, %cst [1] : vector<16x32xf32> to vector<16xf32>
    %5 = vector.shape_cast %4 : vector<16xf32> to vector<16x1xf32>
    %cst_7 = arith.constant 3.200000e+01 : f32
    %6 = vector.broadcast %cst_7 : f32 to vector<16x1xf32>
    %7 = arith.divf %5, %6 : vector<16x1xf32>
    %8 = vector.broadcast %7 : vector<16x1xf32> to vector<16x32xf32>
    %9 = arith.subf %1, %8 : vector<16x32xf32>
    %10 = arith.mulf %9, %9 : vector<16x32xf32>
    %cst_8 = arith.constant dense<0.000000e+00> : vector<16xf32>
    %11 = vector.multi_reduction <add>, %10, %cst_8 [1] : vector<16x32xf32> to vector<16xf32>
    %12 = vector.shape_cast %11 : vector<16xf32> to vector<16x1xf32>
    %cst_9 = arith.constant 3.200000e+01 : f32
    %13 = vector.broadcast %cst_9 : f32 to vector<16x1xf32>
    %14 = arith.divf %12, %13 : vector<16x1xf32>
    %cst_10 = arith.constant 9.99999996E-13 : f32
    %15 = vector.broadcast %cst_10 : f32 to vector<16x1xf32>
    %16 = arith.addf %14, %15 : vector<16x1xf32>
    %17 = math.rsqrt %16 : vector<16x1xf32>
    %18 = vector.broadcast %17 : vector<16x1xf32> to vector<16x32xf32>
    %19 = arith.mulf %9, %18 : vector<16x32xf32>
    %20 = vector.broadcast %2 : vector<1x32xf32> to vector<16x32xf32>
    %21 = arith.mulf %19, %20 : vector<16x32xf32>
    %22 = vector.broadcast %3 : vector<1x32xf32> to vector<16x32xf32>
    %23 = arith.addf %21, %22 : vector<16x32xf32>
    %c0_11 = arith.constant 0 : index
    %c0_12 = arith.constant 0 : index
    %c0_13 = arith.constant 0 : index
    %24 = vector.load %arg6[%c0_11, %c0_12, %c0_13] : memref<2x32x96xf32, #tpu.memory_space<vmem>>, vector<1x32x96xf32>
    %25 = vector.shape_cast %24 : vector<1x32x96xf32> to vector<32x96xf32>
    %cst_14 = arith.constant dense<0.000000e+00> : vector<16x96xf32>
    %26 = tpu.matmul %23, %25, %cst_14 {dimension_numbers = #tpu.dot_dimension_numbers<[1], [0], [0], [1], [0, 0, 1, 1], [], []>} : vector<16x32xf32>, vector<32x96xf32>, vector<16x96xf32> -> vector<16x96xf32>
    %c0_15 = arith.constant 0 : index
    %c0_16 = arith.constant 0 : index
    %c0_17 = arith.constant 0 : index
    %27 = vector.load %arg7[%c0_15, %c0_16, %c0_17] : memref<2x1x96xf32, #tpu.memory_space<vmem>>, vector<1x1x96xf32>
    %28 = vector.shape_cast %27 : vector<1x1x96xf32> to vector<1x96xf32>
    %29 = vector.broadcast %28 : vector<1x96xf32> to vector<16x96xf32>
    %30 = arith.addf %26, %29 : vector<16x96xf32>
    %31 = vector.extract_strided_slice %0 {offsets = [0, 0], sizes = [1, 8], strides = [1, 1]} : vector<2x8xf32> to vector<1x8xf32>
    %32 = vector.extract_strided_slice %30 {offsets = [0, 0], sizes = [8, 16], strides = [1, 1]} : vector<16x96xf32> to vector<8x16xf32>
    %33 = vector.extract_strided_slice %30 {offsets = [0, 32], sizes = [8, 16], strides = [1, 1]} : vector<16x96xf32> to vector<8x16xf32>
    %34 = vector.extract_strided_slice %30 {offsets = [0, 64], sizes = [8, 16], strides = [1, 1]} : vector<16x96xf32> to vector<8x16xf32>
    %35 = tpu.transpose %33, [1, 0] : vector<8x16xf32> -> vector<16x8xf32>
    %cst_18 = arith.constant dense<0.000000e+00> : vector<8x8xf32>
    %36 = tpu.matmul %32, %35, %cst_18 {dimension_numbers = #tpu.dot_dimension_numbers<[1], [0], [0], [1], [0, 0, 1, 1], [], []>} : vector<8x16xf32>, vector<16x8xf32>, vector<8x8xf32> -> vector<8x8xf32>
    %37 = vector.broadcast %31 : vector<1x8xf32> to vector<8x8xf32>
    %38 = arith.addf %36, %37 : vector<8x8xf32>
    %cst_19 = arith.constant dense<0xFF800000> : vector<8xf32>
    %39 = vector.multi_reduction <maximumf>, %38, %cst_19 [1] : vector<8x8xf32> to vector<8xf32>
    %40 = vector.shape_cast %39 : vector<8xf32> to vector<8x1xf32>
    %41 = vector.broadcast %40 : vector<8x1xf32> to vector<8x8xf32>
    %42 = arith.subf %38, %41 : vector<8x8xf32>
    %43 = math.exp %42 : vector<8x8xf32>
    %cst_20 = arith.constant dense<0.000000e+00> : vector<8xf32>
    %44 = vector.multi_reduction <add>, %43, %cst_20 [1] : vector<8x8xf32> to vector<8xf32>
    %45 = vector.shape_cast %44 : vector<8xf32> to vector<8x1xf32>
    %46 = tpu.reciprocal %45 : vector<8x1xf32> -> vector<8x1xf32>
    %47 = vector.broadcast %46 : vector<8x1xf32> to vector<8x8xf32>
    %48 = arith.mulf %43, %47 : vector<8x8xf32>
    %cst_21 = arith.constant dense<0.000000e+00> : vector<8x16xf32>
    %49 = tpu.matmul %48, %34, %cst_21 {dimension_numbers = #tpu.dot_dimension_numbers<[1], [0], [0], [1], [0, 0, 1, 1], [], []>} : vector<8x8xf32>, vector<8x16xf32>, vector<8x16xf32> -> vector<8x16xf32>
    %50 = vector.extract_strided_slice %30 {offsets = [0, 16], sizes = [8, 16], strides = [1, 1]} : vector<16x96xf32> to vector<8x16xf32>
    %51 = vector.extract_strided_slice %30 {offsets = [0, 48], sizes = [8, 16], strides = [1, 1]} : vector<16x96xf32> to vector<8x16xf32>
    %52 = vector.extract_strided_slice %30 {offsets = [0, 80], sizes = [8, 16], strides = [1, 1]} : vector<16x96xf32> to vector<8x16xf32>
    %53 = tpu.transpose %51, [1, 0] : vector<8x16xf32> -> vector<16x8xf32>
    %cst_22 = arith.constant dense<0.000000e+00> : vector<8x8xf32>
    %54 = tpu.matmul %50, %53, %cst_22 {dimension_numbers = #tpu.dot_dimension_numbers<[1], [0], [0], [1], [0, 0, 1, 1], [], []>} : vector<8x16xf32>, vector<16x8xf32>, vector<8x8xf32> -> vector<8x8xf32>
    %55 = vector.broadcast %31 : vector<1x8xf32> to vector<8x8xf32>
    %56 = arith.addf %54, %55 : vector<8x8xf32>
    %cst_23 = arith.constant dense<0xFF800000> : vector<8xf32>
    %57 = vector.multi_reduction <maximumf>, %56, %cst_23 [1] : vector<8x8xf32> to vector<8xf32>
    %58 = vector.shape_cast %57 : vector<8xf32> to vector<8x1xf32>
    %59 = vector.broadcast %58 : vector<8x1xf32> to vector<8x8xf32>
    %60 = arith.subf %56, %59 : vector<8x8xf32>
    %61 = math.exp %60 : vector<8x8xf32>
    %cst_24 = arith.constant dense<0.000000e+00> : vector<8xf32>
    %62 = vector.multi_reduction <add>, %61, %cst_24 [1] : vector<8x8xf32> to vector<8xf32>
    %63 = vector.shape_cast %62 : vector<8xf32> to vector<8x1xf32>
    %64 = tpu.reciprocal %63 : vector<8x1xf32> -> vector<8x1xf32>
    %65 = vector.broadcast %64 : vector<8x1xf32> to vector<8x8xf32>
    %66 = arith.mulf %61, %65 : vector<8x8xf32>
    %cst_25 = arith.constant dense<0.000000e+00> : vector<8x16xf32>
    %67 = tpu.matmul %66, %52, %cst_25 {dimension_numbers = #tpu.dot_dimension_numbers<[1], [0], [0], [1], [0, 0, 1, 1], [], []>} : vector<8x8xf32>, vector<8x16xf32>, vector<8x16xf32> -> vector<8x16xf32>
    %68 = tpu.concatenate %49, %67 in 1 : vector<8x16xf32>, vector<8x16xf32> -> vector<8x32xf32>
    %69 = vector.extract_strided_slice %0 {offsets = [1, 0], sizes = [1, 8], strides = [1, 1]} : vector<2x8xf32> to vector<1x8xf32>
    %70 = vector.extract_strided_slice %30 {offsets = [8, 0], sizes = [8, 16], strides = [1, 1]} : vector<16x96xf32> to vector<8x16xf32>
    %71 = vector.extract_strided_slice %30 {offsets = [8, 32], sizes = [8, 16], strides = [1, 1]} : vector<16x96xf32> to vector<8x16xf32>
    %72 = vector.extract_strided_slice %30 {offsets = [8, 64], sizes = [8, 16], strides = [1, 1]} : vector<16x96xf32> to vector<8x16xf32>
    %73 = tpu.transpose %71, [1, 0] : vector<8x16xf32> -> vector<16x8xf32>
    %cst_26 = arith.constant dense<0.000000e+00> : vector<8x8xf32>
    %74 = tpu.matmul %70, %73, %cst_26 {dimension_numbers = #tpu.dot_dimension_numbers<[1], [0], [0], [1], [0, 0, 1, 1], [], []>} : vector<8x16xf32>, vector<16x8xf32>, vector<8x8xf32> -> vector<8x8xf32>
    %75 = vector.broadcast %69 : vector<1x8xf32> to vector<8x8xf32>
    %76 = arith.addf %74, %75 : vector<8x8xf32>
    %cst_27 = arith.constant dense<0xFF800000> : vector<8xf32>
    %77 = vector.multi_reduction <maximumf>, %76, %cst_27 [1] : vector<8x8xf32> to vector<8xf32>
    %78 = vector.shape_cast %77 : vector<8xf32> to vector<8x1xf32>
    %79 = vector.broadcast %78 : vector<8x1xf32> to vector<8x8xf32>
    %80 = arith.subf %76, %79 : vector<8x8xf32>
    %81 = math.exp %80 : vector<8x8xf32>
    %cst_28 = arith.constant dense<0.000000e+00> : vector<8xf32>
    %82 = vector.multi_reduction <add>, %81, %cst_28 [1] : vector<8x8xf32> to vector<8xf32>
    %83 = vector.shape_cast %82 : vector<8xf32> to vector<8x1xf32>
    %84 = tpu.reciprocal %83 : vector<8x1xf32> -> vector<8x1xf32>
    %85 = vector.broadcast %84 : vector<8x1xf32> to vector<8x8xf32>
    %86 = arith.mulf %81, %85 : vector<8x8xf32>
    %cst_29 = arith.constant dense<0.000000e+00> : vector<8x16xf32>
    %87 = tpu.matmul %86, %72, %cst_29 {dimension_numbers = #tpu.dot_dimension_numbers<[1], [0], [0], [1], [0, 0, 1, 1], [], []>} : vector<8x8xf32>, vector<8x16xf32>, vector<8x16xf32> -> vector<8x16xf32>
    %88 = vector.extract_strided_slice %30 {offsets = [8, 16], sizes = [8, 16], strides = [1, 1]} : vector<16x96xf32> to vector<8x16xf32>
    %89 = vector.extract_strided_slice %30 {offsets = [8, 48], sizes = [8, 16], strides = [1, 1]} : vector<16x96xf32> to vector<8x16xf32>
    %90 = vector.extract_strided_slice %30 {offsets = [8, 80], sizes = [8, 16], strides = [1, 1]} : vector<16x96xf32> to vector<8x16xf32>
    %91 = tpu.transpose %89, [1, 0] : vector<8x16xf32> -> vector<16x8xf32>
    %cst_30 = arith.constant dense<0.000000e+00> : vector<8x8xf32>
    %92 = tpu.matmul %88, %91, %cst_30 {dimension_numbers = #tpu.dot_dimension_numbers<[1], [0], [0], [1], [0, 0, 1, 1], [], []>} : vector<8x16xf32>, vector<16x8xf32>, vector<8x8xf32> -> vector<8x8xf32>
    %93 = vector.broadcast %69 : vector<1x8xf32> to vector<8x8xf32>
    %94 = arith.addf %92, %93 : vector<8x8xf32>
    %cst_31 = arith.constant dense<0xFF800000> : vector<8xf32>
    %95 = vector.multi_reduction <maximumf>, %94, %cst_31 [1] : vector<8x8xf32> to vector<8xf32>
    %96 = vector.shape_cast %95 : vector<8xf32> to vector<8x1xf32>
    %97 = vector.broadcast %96 : vector<8x1xf32> to vector<8x8xf32>
    %98 = arith.subf %94, %97 : vector<8x8xf32>
    %99 = math.exp %98 : vector<8x8xf32>
    %cst_32 = arith.constant dense<0.000000e+00> : vector<8xf32>
    %100 = vector.multi_reduction <add>, %99, %cst_32 [1] : vector<8x8xf32> to vector<8xf32>
    %101 = vector.shape_cast %100 : vector<8xf32> to vector<8x1xf32>
    %102 = tpu.reciprocal %101 : vector<8x1xf32> -> vector<8x1xf32>
    %103 = vector.broadcast %102 : vector<8x1xf32> to vector<8x8xf32>
    %104 = arith.mulf %99, %103 : vector<8x8xf32>
    %cst_33 = arith.constant dense<0.000000e+00> : vector<8x16xf32>
    %105 = tpu.matmul %104, %90, %cst_33 {dimension_numbers = #tpu.dot_dimension_numbers<[1], [0], [0], [1], [0, 0, 1, 1], [], []>} : vector<8x8xf32>, vector<8x16xf32>, vector<8x16xf32> -> vector<8x16xf32>
    %106 = tpu.concatenate %87, %105 in 1 : vector<8x16xf32>, vector<8x16xf32> -> vector<8x32xf32>
    %107 = tpu.concatenate %68, %106 in 0 : vector<8x32xf32>, vector<8x32xf32> -> vector<16x32xf32>
    %c0_34 = arith.constant 0 : index
    %c0_35 = arith.constant 0 : index
    %c0_36 = arith.constant 0 : index
    %108 = vector.load %arg8[%c0_34, %c0_35, %c0_36] : memref<2x32x32xf32, #tpu.memory_space<vmem>>, vector<1x32x32xf32>
    %109 = vector.shape_cast %108 : vector<1x32x32xf32> to vector<32x32xf32>
    %cst_37 = arith.constant dense<0.000000e+00> : vector<16x32xf32>
    %110 = tpu.matmul %107, %109, %cst_37 {dimension_numbers = #tpu.dot_dimension_numbers<[1], [0], [0], [1], [0, 0, 1, 1], [], []>} : vector<16x32xf32>, vector<32x32xf32>, vector<16x32xf32> -> vector<16x32xf32>
    %c0_38 = arith.constant 0 : index
    %c0_39 = arith.constant 0 : index
    %c0_40 = arith.constant 0 : index
    %111 = vector.load %arg9[%c0_38, %c0_39, %c0_40] : memref<2x1x32xf32, #tpu.memory_space<vmem>>, vector<1x1x32xf32>
    %112 = vector.shape_cast %111 : vector<1x1x32xf32> to vector<1x32xf32>
    %113 = vector.broadcast %112 : vector<1x32xf32> to vector<16x32xf32>
    %114 = arith.addf %110, %113 : vector<16x32xf32>
    %115 = arith.addf %23, %114 : vector<16x32xf32>
    %c0_41 = arith.constant 0 : index
    %c0_42 = arith.constant 0 : index
    %c0_43 = arith.constant 0 : index
    %116 = vector.load %arg10[%c0_41, %c0_42, %c0_43] : memref<2x1x32xf32, #tpu.memory_space<vmem>>, vector<1x1x32xf32>
    %117 = vector.shape_cast %116 : vector<1x1x32xf32> to vector<1x32xf32>
    %c0_44 = arith.constant 0 : index
    %c0_45 = arith.constant 0 : index
    %c0_46 = arith.constant 0 : index
    %118 = vector.load %arg11[%c0_44, %c0_45, %c0_46] : memref<2x1x32xf32, #tpu.memory_space<vmem>>, vector<1x1x32xf32>
    %119 = vector.shape_cast %118 : vector<1x1x32xf32> to vector<1x32xf32>
    %cst_47 = arith.constant dense<0.000000e+00> : vector<16xf32>
    %120 = vector.multi_reduction <add>, %115, %cst_47 [1] : vector<16x32xf32> to vector<16xf32>
    %121 = vector.shape_cast %120 : vector<16xf32> to vector<16x1xf32>
    %cst_48 = arith.constant 3.200000e+01 : f32
    %122 = vector.broadcast %cst_48 : f32 to vector<16x1xf32>
    %123 = arith.divf %121, %122 : vector<16x1xf32>
    %124 = vector.broadcast %123 : vector<16x1xf32> to vector<16x32xf32>
    %125 = arith.subf %115, %124 : vector<16x32xf32>
    %126 = arith.mulf %125, %125 : vector<16x32xf32>
    %cst_49 = arith.constant dense<0.000000e+00> : vector<16xf32>
    %127 = vector.multi_reduction <add>, %126, %cst_49 [1] : vector<16x32xf32> to vector<16xf32>
    %128 = vector.shape_cast %127 : vector<16xf32> to vector<16x1xf32>
    %cst_50 = arith.constant 3.200000e+01 : f32
    %129 = vector.broadcast %cst_50 : f32 to vector<16x1xf32>
    %130 = arith.divf %128, %129 : vector<16x1xf32>
    %cst_51 = arith.constant 9.99999996E-13 : f32
    %131 = vector.broadcast %cst_51 : f32 to vector<16x1xf32>
    %132 = arith.addf %130, %131 : vector<16x1xf32>
    %133 = math.rsqrt %132 : vector<16x1xf32>
    %134 = vector.broadcast %133 : vector<16x1xf32> to vector<16x32xf32>
    %135 = arith.mulf %125, %134 : vector<16x32xf32>
    %136 = vector.broadcast %117 : vector<1x32xf32> to vector<16x32xf32>
    %137 = arith.mulf %135, %136 : vector<16x32xf32>
    %138 = vector.broadcast %119 : vector<1x32xf32> to vector<16x32xf32>
    %139 = arith.addf %137, %138 : vector<16x32xf32>
    %c0_52 = arith.constant 0 : index
    %c0_53 = arith.constant 0 : index
    %c0_54 = arith.constant 0 : index
    %140 = vector.load %arg12[%c0_52, %c0_53, %c0_54] : memref<2x32x64xf32, #tpu.memory_space<vmem>>, vector<1x32x64xf32>
    %141 = vector.shape_cast %140 : vector<1x32x64xf32> to vector<32x64xf32>
    %cst_55 = arith.constant dense<0.000000e+00> : vector<16x64xf32>
    %142 = tpu.matmul %139, %141, %cst_55 {dimension_numbers = #tpu.dot_dimension_numbers<[1], [0], [0], [1], [0, 0, 1, 1], [], []>} : vector<16x32xf32>, vector<32x64xf32>, vector<16x64xf32> -> vector<16x64xf32>
    %c0_56 = arith.constant 0 : index
    %c0_57 = arith.constant 0 : index
    %c0_58 = arith.constant 0 : index
    %143 = vector.load %arg13[%c0_56, %c0_57, %c0_58] : memref<2x1x64xf32, #tpu.memory_space<vmem>>, vector<1x1x64xf32>
    %144 = vector.shape_cast %143 : vector<1x1x64xf32> to vector<1x64xf32>
    %145 = vector.broadcast %144 : vector<1x64xf32> to vector<16x64xf32>
    %146 = arith.addf %142, %145 : vector<16x64xf32>
    %cst_59 = arith.constant 5.000000e-01 : f32
    %147 = vector.broadcast %cst_59 : f32 to vector<16x64xf32>
    %148 = arith.mulf %147, %146 : vector<16x64xf32>
    %cst_60 = arith.constant 4.471500e-02 : f32
    %149 = vector.broadcast %cst_60 : f32 to vector<16x64xf32>
    %150 = arith.mulf %149, %146 : vector<16x64xf32>
    %151 = arith.mulf %150, %146 : vector<16x64xf32>
    %152 = arith.mulf %151, %146 : vector<16x64xf32>
    %153 = arith.addf %146, %152 : vector<16x64xf32>
    %cst_61 = arith.constant 0.797884583 : f32
    %154 = vector.broadcast %cst_61 : f32 to vector<16x64xf32>
    %155 = arith.mulf %154, %153 : vector<16x64xf32>
    %156 = math.tanh %155 : vector<16x64xf32>
    %cst_62 = arith.constant 1.000000e+00 : f32
    %157 = vector.broadcast %cst_62 : f32 to vector<16x64xf32>
    %158 = arith.addf %157, %156 : vector<16x64xf32>
    %159 = arith.mulf %148, %158 : vector<16x64xf32>
    %c0_63 = arith.constant 0 : index
    %c0_64 = arith.constant 0 : index
    %c0_65 = arith.constant 0 : index
    %160 = vector.load %arg14[%c0_63, %c0_64, %c0_65] : memref<2x64x32xf32, #tpu.memory_space<vmem>>, vector<1x64x32xf32>
    %161 = vector.shape_cast %160 : vector<1x64x32xf32> to vector<64x32xf32>
    %cst_66 = arith.constant dense<0.000000e+00> : vector<16x32xf32>
    %162 = tpu.matmul %159, %161, %cst_66 {dimension_numbers = #tpu.dot_dimension_numbers<[1], [0], [0], [1], [0, 0, 1, 1], [], []>} : vector<16x64xf32>, vector<64x32xf32>, vector<16x32xf32> -> vector<16x32xf32>
    %c0_67 = arith.constant 0 : index
    %c0_68 = arith.constant 0 : index
    %c0_69 = arith.constant 0 : index
    %163 = vector.load %arg15[%c0_67, %c0_68, %c0_69] : memref<2x1x32xf32, #tpu.memory_space<vmem>>, vector<1x1x32xf32>
    %164 = vector.shape_cast %163 : vector<1x1x32xf32> to vector<1x32xf32>
    %165 = vector.broadcast %164 : vector<1x32xf32> to vector<16x32xf32>
    %166 = arith.addf %162, %165 : vector<16x32xf32>
    %167 = arith.addf %139, %166 : vector<16x32xf32>
    %c0_70 = arith.constant 0 : index
    %c0_71 = arith.constant 0 : index
    %c0_72 = arith.constant 0 : index
    %168 = vector.load %arg16[%c0_70, %c0_71, %c0_72] : memref<2x1x32xf32, #tpu.memory_space<vmem>>, vector<1x1x32xf32>
    %169 = vector.shape_cast %168 : vector<1x1x32xf32> to vector<1x32xf32>
    %c0_73 = arith.constant 0 : index
    %c0_74 = arith.constant 0 : index
    %c0_75 = arith.constant 0 : index
    %170 = vector.load %arg17[%c0_73, %c0_74, %c0_75] : memref<2x1x32xf32, #tpu.memory_space<vmem>>, vector<1x1x32xf32>
    %171 = vector.shape_cast %170 : vector<1x1x32xf32> to vector<1x32xf32>
    %cst_76 = arith.constant dense<0.000000e+00> : vector<16xf32>
    %172 = vector.multi_reduction <add>, %167, %cst_76 [1] : vector<16x32xf32> to vector<16xf32>
    %173 = vector.shape_cast %172 : vector<16xf32> to vector<16x1xf32>
    %cst_77 = arith.constant 3.200000e+01 : f32
    %174 = vector.broadcast %cst_77 : f32 to vector<16x1xf32>
    %175 = arith.divf %173, %174 : vector<16x1xf32>
    %176 = vector.broadcast %175 : vector<16x1xf32> to vector<16x32xf32>
    %177 = arith.subf %167, %176 : vector<16x32xf32>
    %178 = arith.mulf %177, %177 : vector<16x32xf32>
    %cst_78 = arith.constant dense<0.000000e+00> : vector<16xf32>
    %179 = vector.multi_reduction <add>, %178, %cst_78 [1] : vector<16x32xf32> to vector<16xf32>
    %180 = vector.shape_cast %179 : vector<16xf32> to vector<16x1xf32>
    %cst_79 = arith.constant 3.200000e+01 : f32
    %181 = vector.broadcast %cst_79 : f32 to vector<16x1xf32>
    %182 = arith.divf %180, %181 : vector<16x1xf32>
    %cst_80 = arith.constant 9.99999996E-13 : f32
    %183 = vector.broadcast %cst_80 : f32 to vector<16x1xf32>
    %184 = arith.addf %182, %183 : vector<16x1xf32>
    %185 = math.rsqrt %184 : vector<16x1xf32>
    %186 = vector.broadcast %185 : vector<16x1xf32> to vector<16x32xf32>
    %187 = arith.mulf %177, %186 : vector<16x32xf32>
    %188 = vector.broadcast %169 : vector<1x32xf32> to vector<16x32xf32>
    %189 = arith.mulf %187, %188 : vector<16x32xf32>
    %190 = vector.broadcast %171 : vector<1x32xf32> to vector<16x32xf32>
    %191 = arith.addf %189, %190 : vector<16x32xf32>
    %c1 = arith.constant 1 : index
    %c0_81 = arith.constant 0 : index
    %c0_82 = arith.constant 0 : index
    %192 = vector.load %arg6[%c1, %c0_81, %c0_82] : memref<2x32x96xf32, #tpu.memory_space<vmem>>, vector<1x32x96xf32>
    %193 = vector.shape_cast %192 : vector<1x32x96xf32> to vector<32x96xf32>
    %cst_83 = arith.constant dense<0.000000e+00> : vector<16x96xf32>
    %194 = tpu.matmul %191, %193, %cst_83 {dimension_numbers = #tpu.dot_dimension_numbers<[1], [0], [0], [1], [0, 0, 1, 1], [], []>} : vector<16x32xf32>, vector<32x96xf32>, vector<16x96xf32> -> vector<16x96xf32>
    %c1_84 = arith.constant 1 : index
    %c0_85 = arith.constant 0 : index
    %c0_86 = arith.constant 0 : index
    %195 = vector.load %arg7[%c1_84, %c0_85, %c0_86] : memref<2x1x96xf32, #tpu.memory_space<vmem>>, vector<1x1x96xf32>
    %196 = vector.shape_cast %195 : vector<1x1x96xf32> to vector<1x96xf32>
    %197 = vector.broadcast %196 : vector<1x96xf32> to vector<16x96xf32>
    %198 = arith.addf %194, %197 : vector<16x96xf32>
    %199 = vector.extract_strided_slice %0 {offsets = [0, 0], sizes = [1, 8], strides = [1, 1]} : vector<2x8xf32> to vector<1x8xf32>
    %200 = vector.extract_strided_slice %198 {offsets = [0, 0], sizes = [8, 16], strides = [1, 1]} : vector<16x96xf32> to vector<8x16xf32>
    %201 = vector.extract_strided_slice %198 {offsets = [0, 32], sizes = [8, 16], strides = [1, 1]} : vector<16x96xf32> to vector<8x16xf32>
    %202 = vector.extract_strided_slice %198 {offsets = [0, 64], sizes = [8, 16], strides = [1, 1]} : vector<16x96xf32> to vector<8x16xf32>
    %203 = tpu.transpose %201, [1, 0] : vector<8x16xf32> -> vector<16x8xf32>
    %cst_87 = arith.constant dense<0.000000e+00> : vector<8x8xf32>
    %204 = tpu.matmul %200, %203, %cst_87 {dimension_numbers = #tpu.dot_dimension_numbers<[1], [0], [0], [1], [0, 0, 1, 1], [], []>} : vector<8x16xf32>, vector<16x8xf32>, vector<8x8xf32> -> vector<8x8xf32>
    %205 = vector.broadcast %199 : vector<1x8xf32> to vector<8x8xf32>
    %206 = arith.addf %204, %205 : vector<8x8xf32>
    %cst_88 = arith.constant dense<0xFF800000> : vector<8xf32>
    %207 = vector.multi_reduction <maximumf>, %206, %cst_88 [1] : vector<8x8xf32> to vector<8xf32>
    %208 = vector.shape_cast %207 : vector<8xf32> to vector<8x1xf32>
    %209 = vector.broadcast %208 : vector<8x1xf32> to vector<8x8xf32>
    %210 = arith.subf %206, %209 : vector<8x8xf32>
    %211 = math.exp %210 : vector<8x8xf32>
    %cst_89 = arith.constant dense<0.000000e+00> : vector<8xf32>
    %212 = vector.multi_reduction <add>, %211, %cst_89 [1] : vector<8x8xf32> to vector<8xf32>
    %213 = vector.shape_cast %212 : vector<8xf32> to vector<8x1xf32>
    %214 = tpu.reciprocal %213 : vector<8x1xf32> -> vector<8x1xf32>
    %215 = vector.broadcast %214 : vector<8x1xf32> to vector<8x8xf32>
    %216 = arith.mulf %211, %215 : vector<8x8xf32>
    %cst_90 = arith.constant dense<0.000000e+00> : vector<8x16xf32>
    %217 = tpu.matmul %216, %202, %cst_90 {dimension_numbers = #tpu.dot_dimension_numbers<[1], [0], [0], [1], [0, 0, 1, 1], [], []>} : vector<8x8xf32>, vector<8x16xf32>, vector<8x16xf32> -> vector<8x16xf32>
    %218 = vector.extract_strided_slice %198 {offsets = [0, 16], sizes = [8, 16], strides = [1, 1]} : vector<16x96xf32> to vector<8x16xf32>
    %219 = vector.extract_strided_slice %198 {offsets = [0, 48], sizes = [8, 16], strides = [1, 1]} : vector<16x96xf32> to vector<8x16xf32>
    %220 = vector.extract_strided_slice %198 {offsets = [0, 80], sizes = [8, 16], strides = [1, 1]} : vector<16x96xf32> to vector<8x16xf32>
    %221 = tpu.transpose %219, [1, 0] : vector<8x16xf32> -> vector<16x8xf32>
    %cst_91 = arith.constant dense<0.000000e+00> : vector<8x8xf32>
    %222 = tpu.matmul %218, %221, %cst_91 {dimension_numbers = #tpu.dot_dimension_numbers<[1], [0], [0], [1], [0, 0, 1, 1], [], []>} : vector<8x16xf32>, vector<16x8xf32>, vector<8x8xf32> -> vector<8x8xf32>
    %223 = vector.broadcast %199 : vector<1x8xf32> to vector<8x8xf32>
    %224 = arith.addf %222, %223 : vector<8x8xf32>
    %cst_92 = arith.constant dense<0xFF800000> : vector<8xf32>
    %225 = vector.multi_reduction <maximumf>, %224, %cst_92 [1] : vector<8x8xf32> to vector<8xf32>
    %226 = vector.shape_cast %225 : vector<8xf32> to vector<8x1xf32>
    %227 = vector.broadcast %226 : vector<8x1xf32> to vector<8x8xf32>
    %228 = arith.subf %224, %227 : vector<8x8xf32>
    %229 = math.exp %228 : vector<8x8xf32>
    %cst_93 = arith.constant dense<0.000000e+00> : vector<8xf32>
    %230 = vector.multi_reduction <add>, %229, %cst_93 [1] : vector<8x8xf32> to vector<8xf32>
    %231 = vector.shape_cast %230 : vector<8xf32> to vector<8x1xf32>
    %232 = tpu.reciprocal %231 : vector<8x1xf32> -> vector<8x1xf32>
    %233 = vector.broadcast %232 : vector<8x1xf32> to vector<8x8xf32>
    %234 = arith.mulf %229, %233 : vector<8x8xf32>
    %cst_94 = arith.constant dense<0.000000e+00> : vector<8x16xf32>
    %235 = tpu.matmul %234, %220, %cst_94 {dimension_numbers = #tpu.dot_dimension_numbers<[1], [0], [0], [1], [0, 0, 1, 1], [], []>} : vector<8x8xf32>, vector<8x16xf32>, vector<8x16xf32> -> vector<8x16xf32>
    %236 = tpu.concatenate %217, %235 in 1 : vector<8x16xf32>, vector<8x16xf32> -> vector<8x32xf32>
    %237 = vector.extract_strided_slice %0 {offsets = [1, 0], sizes = [1, 8], strides = [1, 1]} : vector<2x8xf32> to vector<1x8xf32>
    %238 = vector.extract_strided_slice %198 {offsets = [8, 0], sizes = [8, 16], strides = [1, 1]} : vector<16x96xf32> to vector<8x16xf32>
    %239 = vector.extract_strided_slice %198 {offsets = [8, 32], sizes = [8, 16], strides = [1, 1]} : vector<16x96xf32> to vector<8x16xf32>
    %240 = vector.extract_strided_slice %198 {offsets = [8, 64], sizes = [8, 16], strides = [1, 1]} : vector<16x96xf32> to vector<8x16xf32>
    %241 = tpu.transpose %239, [1, 0] : vector<8x16xf32> -> vector<16x8xf32>
    %cst_95 = arith.constant dense<0.000000e+00> : vector<8x8xf32>
    %242 = tpu.matmul %238, %241, %cst_95 {dimension_numbers = #tpu.dot_dimension_numbers<[1], [0], [0], [1], [0, 0, 1, 1], [], []>} : vector<8x16xf32>, vector<16x8xf32>, vector<8x8xf32> -> vector<8x8xf32>
    %243 = vector.broadcast %237 : vector<1x8xf32> to vector<8x8xf32>
    %244 = arith.addf %242, %243 : vector<8x8xf32>
    %cst_96 = arith.constant dense<0xFF800000> : vector<8xf32>
    %245 = vector.multi_reduction <maximumf>, %244, %cst_96 [1] : vector<8x8xf32> to vector<8xf32>
    %246 = vector.shape_cast %245 : vector<8xf32> to vector<8x1xf32>
    %247 = vector.broadcast %246 : vector<8x1xf32> to vector<8x8xf32>
    %248 = arith.subf %244, %247 : vector<8x8xf32>
    %249 = math.exp %248 : vector<8x8xf32>
    %cst_97 = arith.constant dense<0.000000e+00> : vector<8xf32>
    %250 = vector.multi_reduction <add>, %249, %cst_97 [1] : vector<8x8xf32> to vector<8xf32>
    %251 = vector.shape_cast %250 : vector<8xf32> to vector<8x1xf32>
    %252 = tpu.reciprocal %251 : vector<8x1xf32> -> vector<8x1xf32>
    %253 = vector.broadcast %252 : vector<8x1xf32> to vector<8x8xf32>
    %254 = arith.mulf %249, %253 : vector<8x8xf32>
    %cst_98 = arith.constant dense<0.000000e+00> : vector<8x16xf32>
    %255 = tpu.matmul %254, %240, %cst_98 {dimension_numbers = #tpu.dot_dimension_numbers<[1], [0], [0], [1], [0, 0, 1, 1], [], []>} : vector<8x8xf32>, vector<8x16xf32>, vector<8x16xf32> -> vector<8x16xf32>
    %256 = vector.extract_strided_slice %198 {offsets = [8, 16], sizes = [8, 16], strides = [1, 1]} : vector<16x96xf32> to vector<8x16xf32>
    %257 = vector.extract_strided_slice %198 {offsets = [8, 48], sizes = [8, 16], strides = [1, 1]} : vector<16x96xf32> to vector<8x16xf32>
    %258 = vector.extract_strided_slice %198 {offsets = [8, 80], sizes = [8, 16], strides = [1, 1]} : vector<16x96xf32> to vector<8x16xf32>
    %259 = tpu.transpose %257, [1, 0] : vector<8x16xf32> -> vector<16x8xf32>
    %cst_99 = arith.constant dense<0.000000e+00> : vector<8x8xf32>
    %260 = tpu.matmul %256, %259, %cst_99 {dimension_numbers = #tpu.dot_dimension_numbers<[1], [0], [0], [1], [0, 0, 1, 1], [], []>} : vector<8x16xf32>, vector<16x8xf32>, vector<8x8xf32> -> vector<8x8xf32>
    %261 = vector.broadcast %237 : vector<1x8xf32> to vector<8x8xf32>
    %262 = arith.addf %260, %261 : vector<8x8xf32>
    %cst_100 = arith.constant dense<0xFF800000> : vector<8xf32>
    %263 = vector.multi_reduction <maximumf>, %262, %cst_100 [1] : vector<8x8xf32> to vector<8xf32>
    %264 = vector.shape_cast %263 : vector<8xf32> to vector<8x1xf32>
    %265 = vector.broadcast %264 : vector<8x1xf32> to vector<8x8xf32>
    %266 = arith.subf %262, %265 : vector<8x8xf32>
    %267 = math.exp %266 : vector<8x8xf32>
    %cst_101 = arith.constant dense<0.000000e+00> : vector<8xf32>
    %268 = vector.multi_reduction <add>, %267, %cst_101 [1] : vector<8x8xf32> to vector<8xf32>
    %269 = vector.shape_cast %268 : vector<8xf32> to vector<8x1xf32>
    %270 = tpu.reciprocal %269 : vector<8x1xf32> -> vector<8x1xf32>
    %271 = vector.broadcast %270 : vector<8x1xf32> to vector<8x8xf32>
    %272 = arith.mulf %267, %271 : vector<8x8xf32>
    %cst_102 = arith.constant dense<0.000000e+00> : vector<8x16xf32>
    %273 = tpu.matmul %272, %258, %cst_102 {dimension_numbers = #tpu.dot_dimension_numbers<[1], [0], [0], [1], [0, 0, 1, 1], [], []>} : vector<8x8xf32>, vector<8x16xf32>, vector<8x16xf32> -> vector<8x16xf32>
    %274 = tpu.concatenate %255, %273 in 1 : vector<8x16xf32>, vector<8x16xf32> -> vector<8x32xf32>
    %275 = tpu.concatenate %236, %274 in 0 : vector<8x32xf32>, vector<8x32xf32> -> vector<16x32xf32>
    %c1_103 = arith.constant 1 : index
    %c0_104 = arith.constant 0 : index
    %c0_105 = arith.constant 0 : index
    %276 = vector.load %arg8[%c1_103, %c0_104, %c0_105] : memref<2x32x32xf32, #tpu.memory_space<vmem>>, vector<1x32x32xf32>
    %277 = vector.shape_cast %276 : vector<1x32x32xf32> to vector<32x32xf32>
    %cst_106 = arith.constant dense<0.000000e+00> : vector<16x32xf32>
    %278 = tpu.matmul %275, %277, %cst_106 {dimension_numbers = #tpu.dot_dimension_numbers<[1], [0], [0], [1], [0, 0, 1, 1], [], []>} : vector<16x32xf32>, vector<32x32xf32>, vector<16x32xf32> -> vector<16x32xf32>
    %c1_107 = arith.constant 1 : index
    %c0_108 = arith.constant 0 : index
    %c0_109 = arith.constant 0 : index
    %279 = vector.load %arg9[%c1_107, %c0_108, %c0_109] : memref<2x1x32xf32, #tpu.memory_space<vmem>>, vector<1x1x32xf32>
    %280 = vector.shape_cast %279 : vector<1x1x32xf32> to vector<1x32xf32>
    %281 = vector.broadcast %280 : vector<1x32xf32> to vector<16x32xf32>
    %282 = arith.addf %278, %281 : vector<16x32xf32>
    %283 = arith.addf %191, %282 : vector<16x32xf32>
    %c1_110 = arith.constant 1 : index
    %c0_111 = arith.constant 0 : index
    %c0_112 = arith.constant 0 : index
    %284 = vector.load %arg10[%c1_110, %c0_111, %c0_112] : memref<2x1x32xf32, #tpu.memory_space<vmem>>, vector<1x1x32xf32>
    %285 = vector.shape_cast %284 : vector<1x1x32xf32> to vector<1x32xf32>
    %c1_113 = arith.constant 1 : index
    %c0_114 = arith.constant 0 : index
    %c0_115 = arith.constant 0 : index
    %286 = vector.load %arg11[%c1_113, %c0_114, %c0_115] : memref<2x1x32xf32, #tpu.memory_space<vmem>>, vector<1x1x32xf32>
    %287 = vector.shape_cast %286 : vector<1x1x32xf32> to vector<1x32xf32>
    %cst_116 = arith.constant dense<0.000000e+00> : vector<16xf32>
    %288 = vector.multi_reduction <add>, %283, %cst_116 [1] : vector<16x32xf32> to vector<16xf32>
    %289 = vector.shape_cast %288 : vector<16xf32> to vector<16x1xf32>
    %cst_117 = arith.constant 3.200000e+01 : f32
    %290 = vector.broadcast %cst_117 : f32 to vector<16x1xf32>
    %291 = arith.divf %289, %290 : vector<16x1xf32>
    %292 = vector.broadcast %291 : vector<16x1xf32> to vector<16x32xf32>
    %293 = arith.subf %283, %292 : vector<16x32xf32>
    %294 = arith.mulf %293, %293 : vector<16x32xf32>
    %cst_118 = arith.constant dense<0.000000e+00> : vector<16xf32>
    %295 = vector.multi_reduction <add>, %294, %cst_118 [1] : vector<16x32xf32> to vector<16xf32>
    %296 = vector.shape_cast %295 : vector<16xf32> to vector<16x1xf32>
    %cst_119 = arith.constant 3.200000e+01 : f32
    %297 = vector.broadcast %cst_119 : f32 to vector<16x1xf32>
    %298 = arith.divf %296, %297 : vector<16x1xf32>
    %cst_120 = arith.constant 9.99999996E-13 : f32
    %299 = vector.broadcast %cst_120 : f32 to vector<16x1xf32>
    %300 = arith.addf %298, %299 : vector<16x1xf32>
    %301 = math.rsqrt %300 : vector<16x1xf32>
    %302 = vector.broadcast %301 : vector<16x1xf32> to vector<16x32xf32>
    %303 = arith.mulf %293, %302 : vector<16x32xf32>
    %304 = vector.broadcast %285 : vector<1x32xf32> to vector<16x32xf32>
    %305 = arith.mulf %303, %304 : vector<16x32xf32>
    %306 = vector.broadcast %287 : vector<1x32xf32> to vector<16x32xf32>
    %307 = arith.addf %305, %306 : vector<16x32xf32>
    %c1_121 = arith.constant 1 : index
    %c0_122 = arith.constant 0 : index
    %c0_123 = arith.constant 0 : index
    %308 = vector.load %arg12[%c1_121, %c0_122, %c0_123] : memref<2x32x64xf32, #tpu.memory_space<vmem>>, vector<1x32x64xf32>
    %309 = vector.shape_cast %308 : vector<1x32x64xf32> to vector<32x64xf32>
    %cst_124 = arith.constant dense<0.000000e+00> : vector<16x64xf32>
    %310 = tpu.matmul %307, %309, %cst_124 {dimension_numbers = #tpu.dot_dimension_numbers<[1], [0], [0], [1], [0, 0, 1, 1], [], []>} : vector<16x32xf32>, vector<32x64xf32>, vector<16x64xf32> -> vector<16x64xf32>
    %c1_125 = arith.constant 1 : index
    %c0_126 = arith.constant 0 : index
    %c0_127 = arith.constant 0 : index
    %311 = vector.load %arg13[%c1_125, %c0_126, %c0_127] : memref<2x1x64xf32, #tpu.memory_space<vmem>>, vector<1x1x64xf32>
    %312 = vector.shape_cast %311 : vector<1x1x64xf32> to vector<1x64xf32>
    %313 = vector.broadcast %312 : vector<1x64xf32> to vector<16x64xf32>
    %314 = arith.addf %310, %313 : vector<16x64xf32>
    %cst_128 = arith.constant 5.000000e-01 : f32
    %315 = vector.broadcast %cst_128 : f32 to vector<16x64xf32>
    %316 = arith.mulf %315, %314 : vector<16x64xf32>
    %cst_129 = arith.constant 4.471500e-02 : f32
    %317 = vector.broadcast %cst_129 : f32 to vector<16x64xf32>
    %318 = arith.mulf %317, %314 : vector<16x64xf32>
    %319 = arith.mulf %318, %314 : vector<16x64xf32>
    %320 = arith.mulf %319, %314 : vector<16x64xf32>
    %321 = arith.addf %314, %320 : vector<16x64xf32>
    %cst_130 = arith.constant 0.797884583 : f32
    %322 = vector.broadcast %cst_130 : f32 to vector<16x64xf32>
    %323 = arith.mulf %322, %321 : vector<16x64xf32>
    %324 = math.tanh %323 : vector<16x64xf32>
    %cst_131 = arith.constant 1.000000e+00 : f32
    %325 = vector.broadcast %cst_131 : f32 to vector<16x64xf32>
    %326 = arith.addf %325, %324 : vector<16x64xf32>
    %327 = arith.mulf %316, %326 : vector<16x64xf32>
    %c1_132 = arith.constant 1 : index
    %c0_133 = arith.constant 0 : index
    %c0_134 = arith.constant 0 : index
    %328 = vector.load %arg14[%c1_132, %c0_133, %c0_134] : memref<2x64x32xf32, #tpu.memory_space<vmem>>, vector<1x64x32xf32>
    %329 = vector.shape_cast %328 : vector<1x64x32xf32> to vector<64x32xf32>
    %cst_135 = arith.constant dense<0.000000e+00> : vector<16x32xf32>
    %330 = tpu.matmul %327, %329, %cst_135 {dimension_numbers = #tpu.dot_dimension_numbers<[1], [0], [0], [1], [0, 0, 1, 1], [], []>} : vector<16x64xf32>, vector<64x32xf32>, vector<16x32xf32> -> vector<16x32xf32>
    %c1_136 = arith.constant 1 : index
    %c0_137 = arith.constant 0 : index
    %c0_138 = arith.constant 0 : index
    %331 = vector.load %arg15[%c1_136, %c0_137, %c0_138] : memref<2x1x32xf32, #tpu.memory_space<vmem>>, vector<1x1x32xf32>
    %332 = vector.shape_cast %331 : vector<1x1x32xf32> to vector<1x32xf32>
    %333 = vector.broadcast %332 : vector<1x32xf32> to vector<16x32xf32>
    %334 = arith.addf %330, %333 : vector<16x32xf32>
    %335 = arith.addf %307, %334 : vector<16x32xf32>
    %c1_139 = arith.constant 1 : index
    %c0_140 = arith.constant 0 : index
    %c0_141 = arith.constant 0 : index
    %336 = vector.load %arg16[%c1_139, %c0_140, %c0_141] : memref<2x1x32xf32, #tpu.memory_space<vmem>>, vector<1x1x32xf32>
    %337 = vector.shape_cast %336 : vector<1x1x32xf32> to vector<1x32xf32>
    %c1_142 = arith.constant 1 : index
    %c0_143 = arith.constant 0 : index
    %c0_144 = arith.constant 0 : index
    %338 = vector.load %arg17[%c1_142, %c0_143, %c0_144] : memref<2x1x32xf32, #tpu.memory_space<vmem>>, vector<1x1x32xf32>
    %339 = vector.shape_cast %338 : vector<1x1x32xf32> to vector<1x32xf32>
    %cst_145 = arith.constant dense<0.000000e+00> : vector<16xf32>
    %340 = vector.multi_reduction <add>, %335, %cst_145 [1] : vector<16x32xf32> to vector<16xf32>
    %341 = vector.shape_cast %340 : vector<16xf32> to vector<16x1xf32>
    %cst_146 = arith.constant 3.200000e+01 : f32
    %342 = vector.broadcast %cst_146 : f32 to vector<16x1xf32>
    %343 = arith.divf %341, %342 : vector<16x1xf32>
    %344 = vector.broadcast %343 : vector<16x1xf32> to vector<16x32xf32>
    %345 = arith.subf %335, %344 : vector<16x32xf32>
    %346 = arith.mulf %345, %345 : vector<16x32xf32>
    %cst_147 = arith.constant dense<0.000000e+00> : vector<16xf32>
    %347 = vector.multi_reduction <add>, %346, %cst_147 [1] : vector<16x32xf32> to vector<16xf32>
    %348 = vector.shape_cast %347 : vector<16xf32> to vector<16x1xf32>
    %cst_148 = arith.constant 3.200000e+01 : f32
    %349 = vector.broadcast %cst_148 : f32 to vector<16x1xf32>
    %350 = arith.divf %348, %349 : vector<16x1xf32>
    %cst_149 = arith.constant 9.99999996E-13 : f32
    %351 = vector.broadcast %cst_149 : f32 to vector<16x1xf32>
    %352 = arith.addf %350, %351 : vector<16x1xf32>
    %353 = math.rsqrt %352 : vector<16x1xf32>
    %354 = vector.broadcast %353 : vector<16x1xf32> to vector<16x32xf32>
    %355 = arith.mulf %345, %354 : vector<16x32xf32>
    %356 = vector.broadcast %337 : vector<1x32xf32> to vector<16x32xf32>
    %357 = arith.mulf %355, %356 : vector<16x32xf32>
    %358 = vector.broadcast %339 : vector<1x32xf32> to vector<16x32xf32>
    %359 = arith.addf %357, %358 : vector<16x32xf32>
    %c0_150 = arith.constant 0 : index
    %c0_151 = arith.constant 0 : index
    %360 = vector.load %arg21[%c0_150, %c0_151] : memref<16x32xf32, #tpu.memory_space<vmem>>, vector<16x32xf32>
    tpu.vector_store %arg21[%c0_150, %c0_151], %359 {strides = array<i32>} : memref<16x32xf32, #tpu.memory_space<vmem>>, vector<16x32xf32>,
    %c0_152 = arith.constant 0 : index
    %c0_153 = arith.constant 0 : index
    %361 = memref.load %arg1[%c0_152, %c0_153] : memref<2x2xi32, #tpu.memory_space<smem>>
    %c0_154 = arith.constant 0 : index
    %c1_155 = arith.constant 1 : index
    %362 = memref.load %arg1[%c0_154, %c1_155] : memref<2x2xi32, #tpu.memory_space<smem>>
    %c0_i32 = arith.constant 0 : i32
    %363 = arith.addi %c0_i32, %361 : i32
    %364 = arith.index_cast %363 : i32 to index
    %c0_156 = arith.constant 0 : index
    %365 = vector.load %arg21[%364, %c0_156] : memref<16x32xf32, #tpu.memory_space<vmem>>, vector<1x32xf32>
    %c0_i32_157 = arith.constant 0 : i32
    %366 = arith.addi %c0_i32_157, %362 : i32
    %367 = arith.index_cast %366 : i32 to index
    %c0_158 = arith.constant 0 : index
    %368 = vector.load %arg21[%367, %c0_158] : memref<16x32xf32, #tpu.memory_space<vmem>>, vector<1x32xf32>
    %369 = tpu.concatenate %365, %368 in 1 : vector<1x32xf32>, vector<1x32xf32> -> vector<1x64xf32>
    %c1_159 = arith.constant 1 : index
    %c0_160 = arith.constant 0 : index
    %370 = memref.load %arg1[%c1_159, %c0_160] : memref<2x2xi32, #tpu.memory_space<smem>>
    %c1_161 = arith.constant 1 : index
    %c1_162 = arith.constant 1 : index
    %371 = memref.load %arg1[%c1_161, %c1_162] : memref<2x2xi32, #tpu.memory_space<smem>>
    %c8_i32 = arith.constant 8 : i32
    %372 = arith.addi %c8_i32, %370 : i32
    %373 = arith.index_cast %372 : i32 to index
    %c0_163 = arith.constant 0 : index
    %374 = vector.load %arg21[%373, %c0_163] : memref<16x32xf32, #tpu.memory_space<vmem>>, vector<1x32xf32>
    %c8_i32_164 = arith.constant 8 : i32
    %375 = arith.addi %c8_i32_164, %371 : i32
    %376 = arith.index_cast %375 : i32 to index
    %c0_165 = arith.constant 0 : index
    %377 = vector.load %arg21[%376, %c0_165] : memref<16x32xf32, #tpu.memory_space<vmem>>, vector<1x32xf32>
    %378 = tpu.concatenate %374, %377 in 1 : vector<1x32xf32>, vector<1x32xf32> -> vector<1x64xf32>
    %379 = tpu.concatenate %369, %378 in 0 : vector<1x64xf32>, vector<1x64xf32> -> vector<2x64xf32>
    %380 = math.tanh %379 : vector<2x64xf32>
    %c0_166 = arith.constant 0 : index
    %c0_167 = arith.constant 0 : index
    %381 = vector.load %arg18[%c0_166, %c0_167] : memref<64x4xf32, #tpu.memory_space<vmem>>, vector<64x4xf32>
    %cst_168 = arith.constant dense<0.000000e+00> : vector<2x4xf32>
    %382 = tpu.matmul %380, %381, %cst_168 {dimension_numbers = #tpu.dot_dimension_numbers<[1], [0], [0], [1], [0, 0, 1, 1], [], []>} : vector<2x64xf32>, vector<64x4xf32>, vector<2x4xf32> -> vector<2x4xf32>
    %c0_169 = arith.constant 0 : index
    %c0_170 = arith.constant 0 : index
    %383 = vector.load %arg19[%c0_169, %c0_170] : memref<1x4xf32, #tpu.memory_space<vmem>>, vector<1x4xf32>
    %384 = vector.broadcast %383 : vector<1x4xf32> to vector<2x4xf32>
    %385 = arith.addf %382, %384 : vector<2x4xf32>
    %cst_171 = arith.constant dense<0xFF800000> : vector<2xf32>
    %386 = vector.multi_reduction <maximumf>, %385, %cst_171 [1] : vector<2x4xf32> to vector<2xf32>
    %387 = vector.shape_cast %386 : vector<2xf32> to vector<2x1xf32>
    %388 = vector.broadcast %387 : vector<2x1xf32> to vector<2x4xf32>
    %389 = arith.subf %385, %388 : vector<2x4xf32>
    %390 = math.exp %389 : vector<2x4xf32>
    %cst_172 = arith.constant dense<0.000000e+00> : vector<2xf32>
    %391 = vector.multi_reduction <add>, %390, %cst_172 [1] : vector<2x4xf32> to vector<2xf32>
    %392 = vector.shape_cast %391 : vector<2xf32> to vector<2x1xf32>
    %393 = math.log %392 : vector<2x1xf32>
    %394 = arith.addf %387, %393 : vector<2x1xf32>
    %395 = vector.broadcast %394 : vector<2x1xf32> to vector<2x4xf32>
    %396 = arith.subf %385, %395 : vector<2x4xf32>
    %c0_173 = arith.constant 0 : index
    %c0_174 = arith.constant 0 : index
    %397 = vector.load %arg20[%c0_173, %c0_174] : memref<2x4xf32, #tpu.memory_space<vmem>>, vector<2x4xf32>
    tpu.vector_store %arg20[%c0_173, %c0_174], %396 {strides = array<i32>} : memref<2x4xf32, #tpu.memory_space<vmem>>, vector<2x4xf32>,
    return
  }
  func.func @transform_0(%arg0: i32, %arg1: memref<2x2xi32, #tpu.memory_space<smem>>) -> (i32, i32) {
    %c0_i32 = arith.constant 0 : i32
    %c0_i32_0 = arith.constant 0 : i32
    %c0_i32_1 = arith.constant 0 : i32
    return %c0_i32, %c0_i32_0 : i32, i32
  }
  func.func @transform_1(%arg0: i32, %arg1: memref<2x2xi32, #tpu.memory_space<smem>>) -> (i32, i32) {
    %c0_i32 = arith.constant 0 : i32
    %c0_i32_0 = arith.constant 0 : i32
    %c0_i32_1 = arith.constant 0 : i32
    return %c0_i32, %c0_i32_0 : i32, i32
  }
  func.func @transform_2(%arg0: i32, %arg1: memref<2x2xi32, #tpu.memory_space<smem>>) -> (i32, i32) {
    %c0_i32 = arith.constant 0 : i32
    %c0_i32_0 = arith.constant 0 : i32
    %c0_i32_1 = arith.constant 0 : i32
    return %c0_i32, %c0_i32_0 : i32, i32
  }
  func.func @transform_3(%arg0: i32, %arg1: memref<2x2xi32, #tpu.memory_space<smem>>) -> (i32, i32) {
    %c0_i32 = arith.constant 0 : i32
    %c0_i32_0 = arith.constant 0 : i32
    %c0_i32_1 = arith.constant 0 : i32
    return %c0_i32, %c0_i32_0 : i32, i32
  }
  func.func @transform_4(%arg0: i32, %arg1: memref<2x2xi32, #tpu.memory_space<smem>>) -> (i32, i32, i32) {
    %c0_i32 = arith.constant 0 : i32
    %c0_i32_0 = arith.constant 0 : i32
    %c0_i32_1 = arith.constant 0 : i32
    %c0_i32_2 = arith.constant 0 : i32
    return %c0_i32, %c0_i32_0, %c0_i32_1 : i32, i32, i32
  }
  func.func @transform_5(%arg0: i32, %arg1: memref<2x2xi32, #tpu.memory_space<smem>>) -> (i32, i32, i32) {
    %c0_i32 = arith.constant 0 : i32
    %c0_i32_0 = arith.constant 0 : i32
    %c0_i32_1 = arith.constant 0 : i32
    %c0_i32_2 = arith.constant 0 : i32
    return %c0_i32, %c0_i32_0, %c0_i32_1 : i32, i32, i32
  }
  func.func @transform_6(%arg0: i32, %arg1: memref<2x2xi32, #tpu.memory_space<smem>>) -> (i32, i32, i32) {
    %c0_i32 = arith.constant 0 : i32
    %c0_i32_0 = arith.constant 0 : i32
    %c0_i32_1 = arith.constant 0 : i32
    %c0_i32_2 = arith.constant 0 : i32
    return %c0_i32, %c0_i32_0, %c0_i32_1 : i32, i32, i32
  }
  func.func @transform_7(%arg0: i32, %arg1: memref<2x2xi32, #tpu.memory_space<smem>>) -> (i32, i32, i32) {
    %c0_i32 = arith.constant 0 : i32
    %c0_i32_0 = arith.constant 0 : i32
    %c0_i32_1 = arith.constant 0 : i32
    %c0_i32_2 = arith.constant 0 : i32
    return %c0_i32, %c0_i32_0, %c0_i32_1 : i32, i32, i32
  }
  func.func @transform_8(%arg0: i32, %arg1: memref<2x2xi32, #tpu.memory_space<smem>>) -> (i32, i32, i32) {
    %c0_i32 = arith.constant 0 : i32
    %c0_i32_0 = arith.constant 0 : i32
    %c0_i32_1 = arith.constant 0 : i32
    %c0_i32_2 = arith.constant 0 : i32
    return %c0_i32, %c0_i32_0, %c0_i32_1 : i32, i32, i32
  }
  func.func @transform_9(%arg0: i32, %arg1: memref<2x2xi32, #tpu.memory_space<smem>>) -> (i32, i32, i32) {
    %c0_i32 = arith.constant 0 : i32
    %c0_i32_0 = arith.constant 0 : i32
    %c0_i32_1 = arith.constant 0 : i32
    %c0_i32_2 = arith.constant 0 : i32
    return %c0_i32, %c0_i32_0, %c0_i32_1 : i32, i32, i32
  }
  func.func @transform_10(%arg0: i32, %arg1: memref<2x2xi32, #tpu.memory_space<smem>>) -> (i32, i32, i32) {
    %c0_i32 = arith.constant 0 : i32
    %c0_i32_0 = arith.constant 0 : i32
    %c0_i32_1 = arith.constant 0 : i32
    %c0_i32_2 = arith.constant 0 : i32
    return %c0_i32, %c0_i32_0, %c0_i32_1 : i32, i32, i32
  }
  func.func @transform_11(%arg0: i32, %arg1: memref<2x2xi32, #tpu.memory_space<smem>>) -> (i32, i32, i32) {
    %c0_i32 = arith.constant 0 : i32
    %c0_i32_0 = arith.constant 0 : i32
    %c0_i32_1 = arith.constant 0 : i32
    %c0_i32_2 = arith.constant 0 : i32
    return %c0_i32, %c0_i32_0, %c0_i32_1 : i32, i32, i32
  }
  func.func @transform_12(%arg0: i32, %arg1: memref<2x2xi32, #tpu.memory_space<smem>>) -> (i32, i32, i32) {
    %c0_i32 = arith.constant 0 : i32
    %c0_i32_0 = arith.constant 0 : i32
    %c0_i32_1 = arith.constant 0 : i32
    %c0_i32_2 = arith.constant 0 : i32
    return %c0_i32, %c0_i32_0, %c0_i32_1 : i32, i32, i32
  }
  func.func @transform_13(%arg0: i32, %arg1: memref<2x2xi32, #tpu.memory_space<smem>>) -> (i32, i32, i32) {
    %c0_i32 = arith.constant 0 : i32
    %c0_i32_0 = arith.constant 0 : i32
    %c0_i32_1 = arith.constant 0 : i32
    %c0_i32_2 = arith.constant 0 : i32
    return %c0_i32, %c0_i32_0, %c0_i32_1 : i32, i32, i32
  }
  func.func @transform_14(%arg0: i32, %arg1: memref<2x2xi32, #tpu.memory_space<smem>>) -> (i32, i32, i32) {
    %c0_i32 = arith.constant 0 : i32
    %c0_i32_0 = arith.constant 0 : i32
    %c0_i32_1 = arith.constant 0 : i32
    %c0_i32_2 = arith.constant 0 : i32
    return %c0_i32, %c0_i32_0, %c0_i32_1 : i32, i32, i32
  }
  func.func @transform_15(%arg0: i32, %arg1: memref<2x2xi32, #tpu.memory_space<smem>>) -> (i32, i32, i32) {
    %c0_i32 = arith.constant 0 : i32
    %c0_i32_0 = arith.constant 0 : i32
    %c0_i32_1 = arith.constant 0 : i32
    %c0_i32_2 = arith.constant 0 : i32
    return %c0_i32, %c0_i32_0, %c0_i32_1 : i32, i32, i32
  }
  func.func @transform_16(%arg0: i32, %arg1: memref<2x2xi32, #tpu.memory_space<smem>>) -> (i32, i32) {
    %c0_i32 = arith.constant 0 : i32
    %c0_i32_0 = arith.constant 0 : i32
    %c0_i32_1 = arith.constant 0 : i32
    return %c0_i32, %c0_i32_0 : i32, i32
  }
  func.func @transform_17(%arg0: i32, %arg1: memref<2x2xi32, #tpu.memory_space<smem>>) -> (i32, i32) {
    %c0_i32 = arith.constant 0 : i32
    %c0_i32_0 = arith.constant 0 : i32
    %c0_i32_1 = arith.constant 0 : i32
    return %c0_i32, %c0_i32_0 : i32, i32
  }
  func.func @transform_18(%arg0: i32, %arg1: memref<2x2xi32, #tpu.memory_space<smem>>) -> (i32, i32) {
    %c0_i32 = arith.constant 0 : i32
    %c0_i32_0 = arith.constant 0 : i32
    %c0_i32_1 = arith.constant 0 : i32
    return %c0_i32, %c0_i32_0 : i32, i32
  }
}

</mosaic_0001>

<llo_original>
// kernel: tpu_custom_call.1
$region0: #{tpu_custom_call.1}
  #allocation0 [shape = 'u32[]', space=smem, size = 0x4, offset = 0x4, fixed_abs, tag = 'smem constant byte address 0x4 - core index']
  #allocation1 [shape = 'u32[72,128]{1,0:T(1,128)}', space=vmem, size = 0x9000, scoped, tag = 'internal scratch']
  #allocation2 [shape = 'f32[16,32]{1,0:T(8,128)}', space=vmem, size = 0x2000, scoped, tag = 'scratch operand']
  #allocation3 [shape = 's32[1]{0}', space=sflag, size = 0x4, scoped, tag = 'scoped memory for tpu_custom_call.1']
  #allocation4 [shape = 'u8[1024]{0}', space=smem, size = 0x400, scoped, tag = 'prefetched SMEM operand 0']
  %s0 = inlined_call_operand.vmem [shape: s32[2,2], index: 0, kind: input, shape index: {}]
  %s1 = inlined_call_operand.hbm [shape: f32[16,32], index: 1, kind: input, shape index: {}]
  %s2 = inlined_call_operand.vmem [shape: f32[2,8], index: 2, kind: input, shape index: {}]
  %s3 = inlined_call_operand.hbm [shape: f32[1,32], index: 3, kind: input, shape index: {}]
  %s4 = inlined_call_operand.hbm [shape: f32[1,32], index: 4, kind: input, shape index: {}]
  %s5 = inlined_call_operand.vmem [shape: f32[2,32,96], index: 5, kind: input, shape index: {}]
  %s6 = inlined_call_operand.vmem [shape: f32[2,1,96], index: 6, kind: input, shape index: {}]
  %s7 = inlined_call_operand.vmem [shape: f32[2,32,32], index: 7, kind: input, shape index: {}]
  %s8 = inlined_call_operand.vmem [shape: f32[2,1,32], index: 8, kind: input, shape index: {}]
  %s9 = inlined_call_operand.vmem [shape: f32[2,1,32], index: 9, kind: input, shape index: {}]
  %s10 = inlined_call_operand.vmem [shape: f32[2,1,32], index: 10, kind: input, shape index: {}]
  %s11 = inlined_call_operand.vmem [shape: f32[2,32,64], index: 11, kind: input, shape index: {}]
  %s12 = inlined_call_operand.hbm [shape: f32[2,1,64], index: 12, kind: input, shape index: {}]
  %s13 = inlined_call_operand.vmem [shape: f32[2,64,32], index: 13, kind: input, shape index: {}]
  %s14 = inlined_call_operand.hbm [shape: f32[2,1,32], index: 14, kind: input, shape index: {}]
  %s15 = inlined_call_operand.vmem [shape: f32[2,1,32], index: 15, kind: input, shape index: {}]
  %s16 = inlined_call_operand.hbm [shape: f32[2,1,32], index: 16, kind: input, shape index: {}]
  %s17 = inlined_call_operand.vmem [shape: f32[64,4], index: 17, kind: input, shape index: {}]
  %s18 = inlined_call_operand.vmem [shape: f32[1,4], index: 18, kind: input, shape index: {}]
  %s19 = inlined_call_operand.hbm [shape: f32[2,4], index: 19, kind: output, shape index: {}]
  %s20 = sld [smem:[#allocation0]]
  $region106: #{tpu_custom_call.1} parent=0
    _
  %s22 = ssub.s32 1, %s20
  %s23 = scalar_select 0, %s22, %s20
  %s25 = sshll.u32 %s0, 4
  %s26 = int_to_ptr.vmem [resolvable:$true] %s25
  %28 = dma.vmem_to_smem %s26, 32, [#allocation4], [#allocation3]
  %30 = dma.done [#allocation3], 32
  %31 = sfence
  $region1: #{tpu_custom_call.1} parent=0
    #allocation5 [shape = 'u8[8192]{0}', space=vmem, size = 0x2000, scoped, tag = 'input window, operand 1, single buffered']
    #allocation6 [shape = 's32[1]{0}', space=sflag, size = 0x4, scoped, tag = 'scoped memory for tpu_custom_call.1']
    #allocation7 [shape = 's32[1]{0}', space=sflag, size = 0x4, scoped, tag = 'scoped memory for tpu_custom_call.1']
    #allocation8 [shape = 'u8[512]{0}', space=vmem, size = 0x400, scoped, tag = 'input window, operand 3, single buffered']
    #allocation9 [shape = 's32[1]{0}', space=sflag, size = 0x4, scoped, tag = 'scoped memory for tpu_custom_call.1']
    #allocation10 [shape = 'u8[512]{0}', space=vmem, size = 0x400, scoped, tag = 'input window, operand 4, single buffered']
    #allocation11 [shape = 'u8[1024]{0}', space=vmem, size = 0x400, scoped, tag = 'input window, operand 12, single buffered']
    #allocation12 [shape = 's32[1]{0}', space=sflag, size = 0x4, scoped, tag = 'scoped memory for tpu_custom_call.1']
    #allocation13 [shape = 'u8[1024]{0}', space=vmem, size = 0x400, scoped, tag = 'input window, operand 14, single buffered']
    #allocation14 [shape = 'u8[1024]{0}', space=vmem, size = 0x400, scoped, tag = 'input window, operand 16, single buffered']
    #allocation15 [shape = 's32[1]{0}', space=sflag, size = 0x4, scoped, tag = 'scoped memory for tpu_custom_call.1']
    #allocation16 [shape = 'u8[1024]{0}', space=vmem, size = 0x400, scoped, tag = 'output window, operand 0, single buffered']
    %32 = vsyncpa [#allocation6], 0
    %33 = vsyncpa [#allocation9], 0
    %34 = vsyncpa [#allocation12], 0
    %35 = vsyncpa [#allocation15], 0
    %36 = vsyncpa [#allocation7], 0
    // Predicated region
    $region2: #{tpu_custom_call.1} parent=1 // pred_check
      _
    $region3: #{tpu_custom_call.1} parent=1 // pred_check_branch
      %38 = sbr.rel (0) target = $region5
    $region4: #{tpu_custom_call.1} parent=1 // pred_region
      %40 = vsyncadd [#allocation6], 0
      %s41 = sshll.u32 %s1, 4
      %s42 = int_to_ptr.hbm [resolvable:$true] %s41
      %s43 = sshll.u32 [#allocation5], 4
      %s44 = int_to_ptr.vmem [resolvable:$true] %s43
      %49 = dma.hbm_to_vmem [thread:$0]  %s42, 256, %s44, [#allocation6], 128, 128, 8
    $region5: #{tpu_custom_call.1} parent=1 // pred_fallthru
      _
    // Predicated region
    $region6: #{tpu_custom_call.1} parent=1 // pred_check
      _
    $region7: #{tpu_custom_call.1} parent=1 // pred_check_branch
      %51 = sbr.rel (0) target = $region9
    $region8: #{tpu_custom_call.1} parent=1 // pred_region
      _
    $region9: #{tpu_custom_call.1} parent=1 // pred_fallthru
      _
    // Predicated region
    $region10: #{tpu_custom_call.1} parent=1 // pred_check
      _
    $region11: #{tpu_custom_call.1} parent=1 // pred_check_branch
      %53 = sbr.rel (0) target = $region13
    $region12: #{tpu_custom_call.1} parent=1 // pred_region
      %55 = vsyncadd [#allocation9], 0
      %s57 = sshll.u32 %s3, 4
      %s58 = int_to_ptr.hbm [resolvable:$true] %s57
      %s59 = sshll.u32 [#allocation8], 4
      %s60 = int_to_ptr.vmem [resolvable:$true] %s59
      %62 = dma.hbm_to_vmem [thread:$0]  %s58, 16, %s60, [#allocation9]
    $region13: #{tpu_custom_call.1} parent=1 // pred_fallthru
      _
    // Predicated region
    $region14: #{tpu_custom_call.1} parent=1 // pred_check
      _
    $region15: #{tpu_custom_call.1} parent=1 // pred_check_branch
      %64 = sbr.rel (0) target = $region17
    $region16: #{tpu_custom_call.1} parent=1 // pred_region
      %66 = vsyncadd [#allocation9], 0
      %s68 = sshll.u32 %s4, 4
      %s69 = int_to_ptr.hbm [resolvable:$true] %s68
      %s70 = sshll.u32 [#allocation10], 4
      %s71 = int_to_ptr.vmem [resolvable:$true] %s70
      %73 = dma.hbm_to_vmem [thread:$0]  %s69, 16, %s71, [#allocation9]
    $region17: #{tpu_custom_call.1} parent=1 // pred_fallthru
      _
    // Predicated region
    $region18: #{tpu_custom_call.1} parent=1 // pred_check
      _
    $region19: #{tpu_custom_call.1} parent=1 // pred_check_branch
      %75 = sbr.rel (0) target = $region21
    $region20: #{tpu_custom_call.1} parent=1 // pred_region
      _
    $region21: #{tpu_custom_call.1} parent=1 // pred_fallthru
      _
    // Predicated region
    $region22: #{tpu_custom_call.1} parent=1 // pred_check
      _
    $region23: #{tpu_custom_call.1} parent=1 // pred_check_branch
      %77 = sbr.rel (0) target = $region25
    $region24: #{tpu_custom_call.1} parent=1 // pred_region
      _
    $region25: #{tpu_custom_call.1} parent=1 // pred_fallthru
      _
    // Predicated region
    $region26: #{tpu_custom_call.1} parent=1 // pred_check
      _
    $region27: #{tpu_custom_call.1} parent=1 // pred_check_branch
      %79 = sbr.rel (0) target = $region29
    $region28: #{tpu_custom_call.1} parent=1 // pred_region
      _
    $region29: #{tpu_custom_call.1} parent=1 // pred_fallthru
      _
    // Predicated region
    $region30: #{tpu_custom_call.1} parent=1 // pred_check
      _
    $region31: #{tpu_custom_call.1} parent=1 // pred_check_branch
      %81 = sbr.rel (0) target = $region33
    $region32: #{tpu_custom_call.1} parent=1 // pred_region
      _
    $region33: #{tpu_custom_call.1} parent=1 // pred_fallthru
      _
    // Predicated region
    $region34: #{tpu_custom_call.1} parent=1 // pred_check
      _
    $region35: #{tpu_custom_call.1} parent=1 // pred_check_branch
      %83 = sbr.rel (0) target = $region37
    $region36: #{tpu_custom_call.1} parent=1 // pred_region
      _
    $region37: #{tpu_custom_call.1} parent=1 // pred_fallthru
      _
    // Predicated region
    $region38: #{tpu_custom_call.1} parent=1 // pred_check
      _
    $region39: #{tpu_custom_call.1} parent=1 // pred_check_branch
      %85 = sbr.rel (0) target = $region41
    $region40: #{tpu_custom_call.1} parent=1 // pred_region
      _
    $region41: #{tpu_custom_call.1} parent=1 // pred_fallthru
      _
    // Predicated region
    $region42: #{tpu_custom_call.1} parent=1 // pred_check
      _
    $region43: #{tpu_custom_call.1} parent=1 // pred_check_branch
      %87 = sbr.rel (0) target = $region45
    $region44: #{tpu_custom_call.1} parent=1 // pred_region
      _
    $region45: #{tpu_custom_call.1} parent=1 // pred_fallthru
      _
    // Predicated region
    $region46: #{tpu_custom_call.1} parent=1 // pred_check
      _
    $region47: #{tpu_custom_call.1} parent=1 // pred_check_branch
      %89 = sbr.rel (0) target = $region49
    $region48: #{tpu_custom_call.1} parent=1 // pred_region
      %91 = vsyncadd [#allocation12], 0
      %s92 = sshll.u32 %s12, 4
      %s93 = int_to_ptr.hbm [resolvable:$true] %s92
      %s94 = sshll.u32 [#allocation11], 4
      %s95 = int_to_ptr.vmem [resolvable:$true] %s94
      %100 = dma.hbm_to_vmem [thread:$0]  %s93, 32, %s95, [#allocation12], 16, 16, 1
    $region49: #{tpu_custom_call.1} parent=1 // pred_fallthru
      _
    // Predicated region
    $region50: #{tpu_custom_call.1} parent=1 // pred_check
      _
    $region51: #{tpu_custom_call.1} parent=1 // pred_check_branch
      %102 = sbr.rel (0) target = $region53
    $region52: #{tpu_custom_call.1} parent=1 // pred_region
      _
    $region53: #{tpu_custom_call.1} parent=1 // pred_fallthru
      _
    // Predicated region
    $region54: #{tpu_custom_call.1} parent=1 // pred_check
      _
    $region55: #{tpu_custom_call.1} parent=1 // pred_check_branch
      %104 = sbr.rel (0) target = $region57
    $region56: #{tpu_custom_call.1} parent=1 // pred_region
      %106 = vsyncadd [#allocation12], 0
      %s107 = sshll.u32 %s14, 4
      %s108 = int_to_ptr.hbm [resolvable:$true] %s107
      %s109 = sshll.u32 [#allocation13], 4
      %s110 = int_to_ptr.vmem [resolvable:$true] %s109
      %115 = dma.hbm_to_vmem [thread:$0]  %s108, 32, %s110, [#allocation12], 16, 16, 1
    $region57: #{tpu_custom_call.1} parent=1 // pred_fallthru
      _
    // Predicated region
    $region58: #{tpu_custom_call.1} parent=1 // pred_check
      _
    $region59: #{tpu_custom_call.1} parent=1 // pred_check_branch
      %117 = sbr.rel (0) target = $region61
    $region60: #{tpu_custom_call.1} parent=1 // pred_region
      _
    $region61: #{tpu_custom_call.1} parent=1 // pred_fallthru
      _
    // Predicated region
    $region62: #{tpu_custom_call.1} parent=1 // pred_check
      _
    $region63: #{tpu_custom_call.1} parent=1 // pred_check_branch
      %119 = sbr.rel (0) target = $region65
    $region64: #{tpu_custom_call.1} parent=1 // pred_region
      %121 = vsyncadd [#allocation15], 0
      %s122 = sshll.u32 %s16, 4
      %s123 = int_to_ptr.hbm [resolvable:$true] %s122
      %s124 = sshll.u32 [#allocation14], 4
      %s125 = int_to_ptr.vmem [resolvable:$true] %s124
      %130 = dma.hbm_to_vmem [thread:$0]  %s123, 32, %s125, [#allocation15], 16, 16, 1
    $region65: #{tpu_custom_call.1} parent=1 // pred_fallthru
      _
    // Predicated region
    $region66: #{tpu_custom_call.1} parent=1 // pred_check
      _
    $region67: #{tpu_custom_call.1} parent=1 // pred_check_branch
      %132 = sbr.rel (0) target = $region69
    $region68: #{tpu_custom_call.1} parent=1 // pred_region
      _
    $region69: #{tpu_custom_call.1} parent=1 // pred_fallthru
      _
    // Predicated region
    $region70: #{tpu_custom_call.1} parent=1 // pred_check
      _
    $region71: #{tpu_custom_call.1} parent=1 // pred_check_branch
      %134 = sbr.rel (0) target = $region73
    $region72: #{tpu_custom_call.1} parent=1 // pred_region
      _
    $region73: #{tpu_custom_call.1} parent=1 // pred_fallthru
      _
    // Predicated region
    $region74: #{tpu_custom_call.1} parent=1 // pred_check
      _
    $region75: #{tpu_custom_call.1} parent=1 // pred_check_branch
      %136 = sbr.rel (0) target = $region77
    $region76: #{tpu_custom_call.1} parent=1 // pred_region
      %138 = dma.done [#allocation6], 256
    $region77: #{tpu_custom_call.1} parent=1 // pred_fallthru
      _
    // Predicated region
    $region78: #{tpu_custom_call.1} parent=1 // pred_check
      _
    $region79: #{tpu_custom_call.1} parent=1 // pred_check_branch
      %140 = sbr.rel (0) target = $region81
    $region80: #{tpu_custom_call.1} parent=1 // pred_region
      %142 = dma.done [#allocation9], 16
    $region81: #{tpu_custom_call.1} parent=1 // pred_fallthru
      _
    // Predicated region
    $region82: #{tpu_custom_call.1} parent=1 // pred_check
      _
    $region83: #{tpu_custom_call.1} parent=1 // pred_check_branch
      %144 = sbr.rel (0) target = $region85
    $region84: #{tpu_custom_call.1} parent=1 // pred_region
      %146 = dma.done [#allocation9], 16
    $region85: #{tpu_custom_call.1} parent=1 // pred_fallthru
      _
    // Predicated region
    $region86: #{tpu_custom_call.1} parent=1 // pred_check
      _
    $region87: #{tpu_custom_call.1} parent=1 // pred_check_branch
      %148 = sbr.rel (0) target = $region89
    $region88: #{tpu_custom_call.1} parent=1 // pred_region
      %150 = dma.done [#allocation12], 32
    $region89: #{tpu_custom_call.1} parent=1 // pred_fallthru
      _
    // Predicated region
    $region90: #{tpu_custom_call.1} parent=1 // pred_check
      _
    $region91: #{tpu_custom_call.1} parent=1 // pred_check_branch
      %152 = sbr.rel (0) target = $region93
    $region92: #{tpu_custom_call.1} parent=1 // pred_region
      %154 = dma.done [#allocation12], 32
    $region93: #{tpu_custom_call.1} parent=1 // pred_fallthru
      _
    // Predicated region
    $region94: #{tpu_custom_call.1} parent=1 // pred_check
      _
    $region95: #{tpu_custom_call.1} parent=1 // pred_check_branch
      %156 = sbr.rel (0) target = $region97
    $region96: #{tpu_custom_call.1} parent=1 // pred_region
      %158 = dma.done [#allocation15], 32
    $region97: #{tpu_custom_call.1} parent=1 // pred_fallthru
      _
    %v159 = vld [vmem:[%s2] sm:$0x3]
    %v160 = vld [vmem:[#allocation5] sm:$0xff]
    %v161 = vld [vmem:[#allocation5 + $0x8] sm:$0xff]
    %v162 = vld [vmem:[#allocation8] sm:$0x1]
    %v163 = vld [vmem:[#allocation10] sm:$0x1]
    %vm164 = vcmask 261120
    %v165 = vsel %vm164, %v160, 0.0
    %166 = vadd.xlane.f32.xlu0 %v165
    %v167 = vpop.xlane.xlu0 %166
    %v168 = vsel %vm164, %v161, 0.0
    %169 = vadd.xlane.f32.xlu0 %v168
    %v170 = vpop.xlane.xlu0 %169
    %v171 = vrcp.pop 32.0
    %v172 = vmul.f32 32.0, %v171
    %v173 = vsub.f32 1.0, %v172
    %v174 = vmul.f32 %v171, %v173
    %v175 = vadd.f32 %v171, %v174
    %vm176 = vweird.f32 %v171
    %v177 = vsel %vm176, %v171, %v175
    %v178 = vmul.f32 %v167, %v177
    %v179 = vmul.f32 %v170, %v177
    %v180 = vsub.f32 %v160, %v178
    %v181 = vsub.f32 %v161, %v179
    %v182 = vmul.f32 %v180, %v180
    %v183 = vmul.f32 %v181, %v181
    %v184 = vsel %vm164, %v182, 0.0
    %185 = vadd.xlane.f32.xlu0 %v184
    %v186 = vpop.xlane.xlu0 %185
    %v187 = vsel %vm164, %v183, 0.0
    %188 = vadd.xlane.f32.xlu0 %v187
    %v189 = vpop.xlane.xlu0 %188
    %v190 = vmul.f32 %v186, %v177
    %v191 = vmul.f32 %v189, %v177
    %v192 = vadd.f32 %v190, 1e-12
    %v193 = vadd.f32 %v191, 1e-12
    %v194 = vrsqrt.pop %v192
    %v195 = vmul.f32 %v194, %v192
    %v196 = vmul.f32 %v195, %v194
    %v197 = vmul.f32 0.5, %v196
    %v198 = vsub.f32 1.5, %v197
    %v199 = vmul.f32 %v194, %v198
    %vm200 = vweird.f32 %v192
    %vm201 = vweird.f32 %v194
    %vm202 = vmor %vm200, %vm201
    %v203 = vsel %vm202, %v194, %v199
    %v204 = vrsqrt.pop %v193
    %v205 = vmul.f32 %v204, %v193
    %v206 = vmul.f32 %v205, %v204
    %v207 = vmul.f32 0.5, %v206
    %v208 = vsub.f32 1.5, %v207
    %v209 = vmul.f32 %v204, %v208
    %vm210 = vweird.f32 %v193
    %vm211 = vweird.f32 %v204
    %vm212 = vmor %vm210, %vm211
    %v213 = vsel %vm212, %v204, %v209
    %v214 = vmul.f32 %v180, %v203
    %v215 = vmul.f32 %v181, %v213
    %v217 = vperm.slane %v162, 0
    %v219 = vmul.f32 %v214, %v217
    %v220 = vmul.f32 %v215, %v217
    %v222 = vperm.slane %v163, 0
    %v224 = vadd.f32 %v219, %v222
    %v225 = vadd.f32 %v220, %v222
    %v226 = vld [vmem:[%s5] sm:$0xff]
    %v227 = vld [vmem:[%s5 + $0x8] sm:$0xff]
    %v228 = vld [vmem:[%s5 + $0x10] sm:$0xff]
    %v229 = vld [vmem:[%s5 + $0x18] sm:$0xff]
    %v230 = vld [vmem:[%s6] sm:$0x1]
    %v232 = vperm.slane %v230, 0
    %v235 = vsel %vm164, %v224, 0
    %v238 = vsel %vm164, %v225, 0
    %240 = vmatpush.msra.mxu0 0.0
    %241 = vmatpush.msra.mxu0 0.0
    %242 = vmatpush.msra.mxu0 0.0
    %243 = vmatpush.msra.mxu0 0.0
    %244 = vmatpush.msra.mxu0 0.0
    %245 = vmatpush.msra.mxu0 0.0
    %246 = vmatpush.msra.mxu0 0.0
    %247 = vmatpush.msra.mxu0 0.0
    %248 = vmatpush.msra.mxu0 0.0
    %249 = vmatpush.msra.mxu0 0.0
    %250 = vmatpush.msra.mxu0 0.0
    %251 = vmatpush.msra.mxu0 0.0
    %252 = vmatpush.msra.mxu0 %v229
    %253 = vmatpush.msra.mxu0 %v228
    %254 = vmatpush.msra.mxu0 %v227
    %255 = vmatpush.msra.mxu0 %v226
    %256 = vmatmul.f32.gmra.mxu0 %v235
    %v257 = vpop.f32.mrf.mxu0
    %v258 = vadd.f32 %v232, %v257
    %259 = vmatmul.f32.gmra.mxu0 %v238
    %v260 = vpop.f32.mrf.mxu0
    %v261 = vadd.f32 %v232, %v260
    %262 = vdwg.mxu0
    %v263 = vperm.slane %v159, 0
    %265 = vrot.lane.b32.xlu0 %v258, 96
    %v266 = vpop.permute.xlu0 %265
    %vm267 = vcmask 130048
    %v268 = vsel %vm267, %v258, 0
    %v270 = vsel %vm267, %v266, 0
    %272 = vmatpush.xpose.msra.mxu0 0.0
    %273 = vmatpush.xpose.msra.mxu0 0.0
    %274 = vmatpush.xpose.msra.mxu0 0.0
    %275 = vmatpush.xpose.msra.mxu0 0.0
    %276 = vmatpush.xpose.msra.mxu0 0.0
    %277 = vmatpush.xpose.msra.mxu0 0.0
    %278 = vmatpush.xpose.msra.mxu0 0.0
    %279 = vmatpush.xpose.msra.mxu0 0.0
    %280 = vmatpush.xpose.msra.mxu0 0.0
    %281 = vmatpush.xpose.msra.mxu0 0.0
    %282 = vmatpush.xpose.msra.mxu0 0.0
    %283 = vmatpush.xpose.msra.mxu0 0.0
    %284 = vmatpush.xpose.msra.mxu0 0.0
    %285 = vmatpush.xpose.msra.mxu0 0.0
    %286 = vmatpush.xpose.msra.mxu0 0.0
    %287 = vmatpush.xpose.msra.mxu0 %v270
    %288 = vmatmul.f32.gmra.mxu0 %v268
    %v289 = vpop.f32.mrf.mxu0
    %v290 = vadd.f32 %v263, %v289
    %291 = vdwg.mxu0
    %vm292 = vcmask 64512
    %v293 = vsel %vm292, %v290, -inf
    %294 = vmax.xlane.f32.xlu0 %v293
    %v295 = vpop.xlane.xlu0 %294
    %v296 = vsub.f32 %v290, %v295
    %v297 = vmul.f32 %v296, 1.442695
    %v298 = vpow.pop %v297
    %v299 = vsel %vm292, %v298, 0.0
    %300 = vadd.xlane.f32.xlu0 %v299
    %v301 = vpop.xlane.xlu0 %300
    %v302 = vrcp.pop %v301
    %v303 = vmul.f32 %v301, %v302
    %v304 = vsub.f32 1.0, %v303
    %v305 = vmul.f32 %v302, %v304
    %v306 = vadd.f32 %v302, %v305
    %vm307 = vweird.f32 %v301
    %vm308 = vweird.f32 %v302
    %vm309 = vmor %vm307, %vm308
    %v310 = vsel %vm309, %v302, %v306
    %v311 = vand.u32 2147483647, %v301
    %vm312 = vcmp.eq.f32.partialorder %v311, 8.507059e+37
    %v313 = vand.u32 %v301, 2147483648
    %v314 = vor.u32 1.1754944e-38, %v313
    %v315 = vsel %vm312, %v314, %v310
    %v316 = vmul.f32 %v298, %v315
    %317 = vrot.lane.b32.xlu0 %v258, 64
    %v318 = vpop.permute.xlu0 %317
    %v321 = vsel %vm292, %v316, 0
    %323 = vmatpush.msra.mxu0 0.0
    %324 = vmatpush.msra.mxu0 0.0
    %325 = vmatpush.msra.mxu0 0.0
    %326 = vmatpush.msra.mxu0 0.0
    %327 = vmatpush.msra.mxu0 0.0
    %328 = vmatpush.msra.mxu0 0.0
    %329 = vmatpush.msra.mxu0 0.0
    %330 = vmatpush.msra.mxu0 0.0
    %331 = vmatpush.msra.mxu0 0.0
    %332 = vmatpush.msra.mxu0 0.0
    %333 = vmatpush.msra.mxu0 0.0
    %334 = vmatpush.msra.mxu0 0.0
    %335 = vmatpush.msra.mxu0 0.0
    %336 = vmatpush.msra.mxu0 0.0
    %337 = vmatpush.msra.mxu0 0.0
    %338 = vmatpush.msra.mxu0 %v318
    %339 = vmatmul.f32.gmra.mxu0 %v321
    %v340 = vpop.f32.mrf.mxu0
    %v341 = vadd.f32 0.0, %v340
    %342 = vdwg.mxu0
    %343 = vrot.lane.b32.xlu0 %v258, 112
    %v344 = vpop.permute.xlu0 %343
    %345 = vrot.lane.b32.xlu0 %v258, 80
    %v346 = vpop.permute.xlu0 %345
    %v347 = vsel %vm267, %v344, 0
    %v349 = vsel %vm267, %v346, 0
    %351 = vmatpush.xpose.msra.mxu0 0.0
    %352 = vmatpush.xpose.msra.mxu0 0.0
    %353 = vmatpush.xpose.msra.mxu0 0.0
    %354 = vmatpush.xpose.msra.mxu0 0.0
    %355 = vmatpush.xpose.msra.mxu0 0.0
    %356 = vmatpush.xpose.msra.mxu0 0.0
    %357 = vmatpush.xpose.msra.mxu0 0.0
    %358 = vmatpush.xpose.msra.mxu0 0.0
    %359 = vmatpush.xpose.msra.mxu0 0.0
    %360 = vmatpush.xpose.msra.mxu0 0.0
    %361 = vmatpush.xpose.msra.mxu0 0.0
    %362 = vmatpush.xpose.msra.mxu0 0.0
    %363 = vmatpush.xpose.msra.mxu0 0.0
    %364 = vmatpush.xpose.msra.mxu0 0.0
    %365 = vmatpush.xpose.msra.mxu0 0.0
    %366 = vmatpush.xpose.msra.mxu0 %v349
    %367 = vmatmul.f32.gmra.mxu0 %v347
    %v368 = vpop.f32.mrf.mxu0
    %v369 = vadd.f32 %v263, %v368
    %370 = vdwg.mxu0
    %v371 = vsel %vm292, %v369, -inf
    %372 = vmax.xlane.f32.xlu0 %v371
    %v373 = vpop.xlane.xlu0 %372
    %v374 = vsub.f32 %v369, %v373
    %v375 = vmul.f32 %v374, 1.442695
    %v376 = vpow.pop %v375
    %v377 = vsel %vm292, %v376, 0.0
    %378 = vadd.xlane.f32.xlu0 %v377
    %v379 = vpop.xlane.xlu0 %378
    %v380 = vrcp.pop %v379
    %v381 = vmul.f32 %v379, %v380
    %v382 = vsub.f32 1.0, %v381
    %v383 = vmul.f32 %v380, %v382
    %v384 = vadd.f32 %v380, %v383
    %vm385 = vweird.f32 %v379
    %vm386 = vweird.f32 %v380
    %vm387 = vmor %vm385, %vm386
    %v388 = vsel %vm387, %v380, %v384
    %v389 = vand.u32 2147483647, %v379
    %vm390 = vcmp.eq.f32.partialorder %v389, 8.507059e+37
    %v391 = vand.u32 %v379, 2147483648
    %v392 = vor.u32 1.1754944e-38, %v391
    %v393 = vsel %vm390, %v392, %v388
    %v394 = vmul.f32 %v376, %v393
    %395 = vrot.lane.b32.xlu0 %v258, 48
    %v396 = vpop.permute.xlu0 %395
    %v399 = vsel %vm292, %v394, 0
    %401 = vmatpush.msra.mxu0 0.0
    %402 = vmatpush.msra.mxu0 0.0
    %403 = vmatpush.msra.mxu0 0.0
    %404 = vmatpush.msra.mxu0 0.0
    %405 = vmatpush.msra.mxu0 0.0
    %406 = vmatpush.msra.mxu0 0.0
    %407 = vmatpush.msra.mxu0 0.0
    %408 = vmatpush.msra.mxu0 0.0
    %409 = vmatpush.msra.mxu0 0.0
    %410 = vmatpush.msra.mxu0 0.0
    %411 = vmatpush.msra.mxu0 0.0
    %412 = vmatpush.msra.mxu0 0.0
    %413 = vmatpush.msra.mxu0 0.0
    %414 = vmatpush.msra.mxu0 0.0
    %415 = vmatpush.msra.mxu0 0.0
    %416 = vmatpush.msra.mxu0 %v396
    %417 = vmatmul.f32.gmra.mxu0 %v399
    %v418 = vpop.f32.mrf.mxu0
    %v419 = vadd.f32 0.0, %v418
    %420 = vdwg.mxu0
    %422 = vrot.lane.b32.xlu0 %v419, 16
    %v423 = vpop.permute.xlu0 %422
    %v425 = vsel %vm267, %v341, %v423
    %v426 = vperm.slane %v159, 1
    %428 = vrot.lane.b32.xlu0 %v261, 96
    %v429 = vpop.permute.xlu0 %428
    %v430 = vsel %vm267, %v261, 0
    %v432 = vsel %vm267, %v429, 0
    %434 = vmatpush.xpose.msra.mxu0 0.0
    %435 = vmatpush.xpose.msra.mxu0 0.0
    %436 = vmatpush.xpose.msra.mxu0 0.0
    %437 = vmatpush.xpose.msra.mxu0 0.0
    %438 = vmatpush.xpose.msra.mxu0 0.0
    %439 = vmatpush.xpose.msra.mxu0 0.0
    %440 = vmatpush.xpose.msra.mxu0 0.0
    %441 = vmatpush.xpose.msra.mxu0 0.0
    %442 = vmatpush.xpose.msra.mxu0 0.0
    %443 = vmatpush.xpose.msra.mxu0 0.0
    %444 = vmatpush.xpose.msra.mxu0 0.0
    %445 = vmatpush.xpose.msra.mxu0 0.0
    %446 = vmatpush.xpose.msra.mxu0 0.0
    %447 = vmatpush.xpose.msra.mxu0 0.0
    %448 = vmatpush.xpose.msra.mxu0 0.0
    %449 = vmatpush.xpose.msra.mxu0 %v432
    %450 = vmatmul.f32.gmra.mxu0 %v430
    %v451 = vpop.f32.mrf.mxu0
    %v452 = vadd.f32 %v426, %v451
    %453 = vdwg.mxu0
    %v454 = vsel %vm292, %v452, -inf
    %455 = vmax.xlane.f32.xlu0 %v454
    %v456 = vpop.xlane.xlu0 %455
    %v457 = vsub.f32 %v452, %v456
    %v458 = vmul.f32 %v457, 1.442695
    %v459 = vpow.pop %v458
    %v460 = vsel %vm292, %v459, 0.0
    %461 = vadd.xlane.f32.xlu0 %v460
    %v462 = vpop.xlane.xlu0 %461
    %v463 = vrcp.pop %v462
    %v464 = vmul.f32 %v462, %v463
    %v465 = vsub.f32 1.0, %v464
    %v466 = vmul.f32 %v463, %v465
    %v467 = vadd.f32 %v463, %v466
    %vm468 = vweird.f32 %v462
    %vm469 = vweird.f32 %v463
    %vm470 = vmor %vm468, %vm469
    %v471 = vsel %vm470, %v463, %v467
    %v472 = vand.u32 2147483647, %v462
    %vm473 = vcmp.eq.f32.partialorder %v472, 8.507059e+37
    %v474 = vand.u32 %v462, 2147483648
    %v475 = vor.u32 1.1754944e-38, %v474
    %v476 = vsel %vm473, %v475, %v471
    %v477 = vmul.f32 %v459, %v476
    %478 = vrot.lane.b32.xlu0 %v261, 64
    %v479 = vpop.permute.xlu0 %478
    %v482 = vsel %vm292, %v477, 0
    %484 = vmatpush.msra.mxu0 0.0
    %485 = vmatpush.msra.mxu0 0.0
    %486 = vmatpush.msra.mxu0 0.0
    %487 = vmatpush.msra.mxu0 0.0
    %488 = vmatpush.msra.mxu0 0.0
    %489 = vmatpush.msra.mxu0 0.0
    %490 = vmatpush.msra.mxu0 0.0
    %491 = vmatpush.msra.mxu0 0.0
    %492 = vmatpush.msra.mxu0 0.0
    %493 = vmatpush.msra.mxu0 0.0
    %494 = vmatpush.msra.mxu0 0.0
    %495 = vmatpush.msra.mxu0 0.0
    %496 = vmatpush.msra.mxu0 0.0
    %497 = vmatpush.msra.mxu0 0.0
    %498 = vmatpush.msra.mxu0 0.0
    %499 = vmatpush.msra.mxu0 %v479
    %500 = vmatmul.f32.gmra.mxu0 %v482
    %v501 = vpop.f32.mrf.mxu0
    %v502 = vadd.f32 0.0, %v501
    %503 = vdwg.mxu0
    %504 = vrot.lane.b32.xlu0 %v261, 112
    %v505 = vpop.permute.xlu0 %504
    %506 = vrot.lane.b32.xlu0 %v261, 80
    %v507 = vpop.permute.xlu0 %506
    %v508 = vsel %vm267, %v505, 0
    %v510 = vsel %vm267, %v507, 0
    %512 = vmatpush.xpose.msra.mxu0 0.0
    %513 = vmatpush.xpose.msra.mxu0 0.0
    %514 = vmatpush.xpose.msra.mxu0 0.0
    %515 = vmatpush.xpose.msra.mxu0 0.0
    %516 = vmatpush.xpose.msra.mxu0 0.0
    %517 = vmatpush.xpose.msra.mxu0 0.0
    %518 = vmatpush.xpose.msra.mxu0 0.0
    %519 = vmatpush.xpose.msra.mxu0 0.0
    %520 = vmatpush.xpose.msra.mxu0 0.0
    %521 = vmatpush.xpose.msra.mxu0 0.0
    %522 = vmatpush.xpose.msra.mxu0 0.0
    %523 = vmatpush.xpose.msra.mxu0 0.0
    %524 = vmatpush.xpose.msra.mxu0 0.0
    %525 = vmatpush.xpose.msra.mxu0 0.0
    %526 = vmatpush.xpose.msra.mxu0 0.0
    %527 = vmatpush.xpose.msra.mxu0 %v510
    %528 = vmatmul.f32.gmra.mxu0 %v508
    %v529 = vpop.f32.mrf.mxu0
    %v530 = vadd.f32 %v426, %v529
    %531 = vdwg.mxu0
    %v532 = vsel %vm292, %v530, -inf
    %533 = vmax.xlane.f32.xlu0 %v532
    %v534 = vpop.xlane.xlu0 %533
    %v535 = vsub.f32 %v530, %v534
    %v536 = vmul.f32 %v535, 1.442695
    %v537 = vpow.pop %v536
    %v538 = vsel %vm292, %v537, 0.0
    %539 = vadd.xlane.f32.xlu0 %v538
    %v540 = vpop.xlane.xlu0 %539
    %v541 = vrcp.pop %v540
    %v542 = vmul.f32 %v540, %v541
    %v543 = vsub.f32 1.0, %v542
    %v544 = vmul.f32 %v541, %v543
    %v545 = vadd.f32 %v541, %v544
    %vm546 = vweird.f32 %v540
    %vm547 = vweird.f32 %v541
    %vm548 = vmor %vm546, %vm547
    %v549 = vsel %vm548, %v541, %v545
    %v550 = vand.u32 2147483647, %v540
    %vm551 = vcmp.eq.f32.partialorder %v550, 8.507059e+37
    %v552 = vand.u32 %v540, 2147483648
    %v553 = vor.u32 1.1754944e-38, %v552
    %v554 = vsel %vm551, %v553, %v549
    %v555 = vmul.f32 %v537, %v554
    %556 = vrot.lane.b32.xlu0 %v261, 48
    %v557 = vpop.permute.xlu0 %556
    %v560 = vsel %vm292, %v555, 0
    %562 = vmatpush.msra.mxu0 0.0
    %563 = vmatpush.msra.mxu0 0.0
    %564 = vmatpush.msra.mxu0 0.0
    %565 = vmatpush.msra.mxu0 0.0
    %566 = vmatpush.msra.mxu0 0.0
    %567 = vmatpush.msra.mxu0 0.0
    %568 = vmatpush.msra.mxu0 0.0
    %569 = vmatpush.msra.mxu0 0.0
    %570 = vmatpush.msra.mxu0 0.0
    %571 = vmatpush.msra.mxu0 0.0
    %572 = vmatpush.msra.mxu0 0.0
    %573 = vmatpush.msra.mxu0 0.0
    %574 = vmatpush.msra.mxu0 0.0
    %575 = vmatpush.msra.mxu0 0.0
    %576 = vmatpush.msra.mxu0 0.0
    %577 = vmatpush.msra.mxu0 %v557
    %578 = vmatmul.f32.gmra.mxu0 %v560
    %v579 = vpop.f32.mrf.mxu0
    %v580 = vadd.f32 0.0, %v579
    %581 = vdwg.mxu0
    %583 = vrot.lane.b32.xlu0 %v580, 16
    %v584 = vpop.permute.xlu0 %583
    %v586 = vsel %vm267, %v502, %v584
    %v587 = vld [vmem:[%s7] sm:$0xff]
    %v588 = vld [vmem:[%s7 + $0x8] sm:$0xff]
    %v589 = vld [vmem:[%s7 + $0x10] sm:$0xff]
    %v590 = vld [vmem:[%s7 + $0x18] sm:$0xff]
    %v591 = vld [vmem:[%s8] sm:$0x1]
    %v593 = vperm.slane %v591, 0
    %v596 = vsel %vm164, %v425, 0
    %v599 = vsel %vm164, %v586, 0
    %601 = vmatpush.msra.mxu0 0.0
    %602 = vmatpush.msra.mxu0 0.0
    %603 = vmatpush.msra.mxu0 0.0
    %604 = vmatpush.msra.mxu0 0.0
    %605 = vmatpush.msra.mxu0 0.0
    %606 = vmatpush.msra.mxu0 0.0
    %607 = vmatpush.msra.mxu0 0.0
    %608 = vmatpush.msra.mxu0 0.0
    %609 = vmatpush.msra.mxu0 0.0
    %610 = vmatpush.msra.mxu0 0.0
    %611 = vmatpush.msra.mxu0 0.0
    %612 = vmatpush.msra.mxu0 0.0
    %613 = vmatpush.msra.mxu0 %v590
    %614 = vmatpush.msra.mxu0 %v589
    %615 = vmatpush.msra.mxu0 %v588
    %616 = vmatpush.msra.mxu0 %v587
    %617 = vmatmul.f32.gmra.mxu0 %v596
    %v618 = vpop.f32.mrf.mxu0
    %v619 = vadd.f32 %v593, %v618
    %620 = vmatmul.f32.gmra.mxu0 %v599
    %v621 = vpop.f32.mrf.mxu0
    %v622 = vadd.f32 %v593, %v621
    %623 = vdwg.mxu0
    %v624 = vadd.f32 %v224, %v619
    %v625 = vadd.f32 %v225, %v622
    %v626 = vld [vmem:[%s9] sm:$0x1]
    %v627 = vld [vmem:[%s10] sm:$0x1]
    %v628 = vsel %vm164, %v624, 0.0
    %629 = vadd.xlane.f32.xlu0 %v628
    %v630 = vpop.xlane.xlu0 %629
    %v631 = vsel %vm164, %v625, 0.0
    %632 = vadd.xlane.f32.xlu0 %v631
    %v633 = vpop.xlane.xlu0 %632
    %v634 = vmul.f32 %v630, %v177
    %v635 = vmul.f32 %v633, %v177
    %v636 = vsub.f32 %v624, %v634
    %v637 = vsub.f32 %v625, %v635
    %v638 = vmul.f32 %v636, %v636
    %v639 = vmul.f32 %v637, %v637
    %v640 = vsel %vm164, %v638, 0.0
    %641 = vadd.xlane.f32.xlu0 %v640
    %v642 = vpop.xlane.xlu0 %641
    %v643 = vsel %vm164, %v639, 0.0
    %644 = vadd.xlane.f32.xlu0 %v643
    %v645 = vpop.xlane.xlu0 %644
    %v646 = vmul.f32 %v642, %v177
    %v647 = vmul.f32 %v645, %v177
    %v648 = vadd.f32 %v646, 1e-12
    %v649 = vadd.f32 %v647, 1e-12
    %v650 = vrsqrt.pop %v648
    %v651 = vmul.f32 %v650, %v648
    %v652 = vmul.f32 %v651, %v650
    %v653 = vmul.f32 0.5, %v652
    %v654 = vsub.f32 1.5, %v653
    %v655 = vmul.f32 %v650, %v654
    %vm656 = vweird.f32 %v648
    %vm657 = vweird.f32 %v650
    %vm658 = vmor %vm656, %vm657
    %v659 = vsel %vm658, %v650, %v655
    %v660 = vrsqrt.pop %v649
    %v661 = vmul.f32 %v660, %v649
    %v662 = vmul.f32 %v661, %v660
    %v663 = vmul.f32 0.5, %v662
    %v664 = vsub.f32 1.5, %v663
    %v665 = vmul.f32 %v660, %v664
    %vm666 = vweird.f32 %v649
    %vm667 = vweird.f32 %v660
    %vm668 = vmor %vm666, %vm667
    %v669 = vsel %vm668, %v660, %v665
    %v670 = vmul.f32 %v636, %v659
    %v671 = vmul.f32 %v637, %v669
    %v673 = vperm.slane %v626, 0
    %v675 = vmul.f32 %v670, %v673
    %v676 = vmul.f32 %v671, %v673
    %v678 = vperm.slane %v627, 0
    %v680 = vadd.f32 %v675, %v678
    %v681 = vadd.f32 %v676, %v678
    %v682 = vld [vmem:[%s11] sm:$0xff]
    %v683 = vld [vmem:[%s11 + $0x8] sm:$0xff]
    %v684 = vld [vmem:[%s11 + $0x10] sm:$0xff]
    %v685 = vld [vmem:[%s11 + $0x18] sm:$0xff]
    %v686 = vld [vmem:[#allocation11] sm:$0x1]
    %v688 = vperm.slane %v686, 0
    %v691 = vsel %vm164, %v680, 0
    %v694 = vsel %vm164, %v681, 0
    %696 = vmatpush.msra.mxu0 0.0
    %697 = vmatpush.msra.mxu0 0.0
    %698 = vmatpush.msra.mxu0 0.0
    %699 = vmatpush.msra.mxu0 0.0
    %700 = vmatpush.msra.mxu0 0.0
    %701 = vmatpush.msra.mxu0 0.0
    %702 = vmatpush.msra.mxu0 0.0
    %703 = vmatpush.msra.mxu0 0.0
    %704 = vmatpush.msra.mxu0 0.0
    %705 = vmatpush.msra.mxu0 0.0
    %706 = vmatpush.msra.mxu0 0.0
    %707 = vmatpush.msra.mxu0 0.0
    %708 = vmatpush.msra.mxu0 %v685
    %709 = vmatpush.msra.mxu0 %v684
    %710 = vmatpush.msra.mxu0 %v683
    %711 = vmatpush.msra.mxu0 %v682
    %712 = vmatmul.f32.gmra.mxu0 %v691
    %v713 = vpop.f32.mrf.mxu0
    %v714 = vadd.f32 %v688, %v713
    %715 = vmatmul.f32.gmra.mxu0 %v694
    %v716 = vpop.f32.mrf.mxu0
    %v717 = vadd.f32 %v688, %v716
    %718 = vdwg.mxu0
    %v719 = vmul.f32 %v714, 0.5
    %v720 = vmul.f32 %v717, 0.5
    %v721 = vmul.f32 %v714, 0.044715
    %v722 = vmul.f32 %v717, 0.044715
    %v723 = vmul.f32 %v721, %v714
    %v724 = vmul.f32 %v722, %v717
    %v725 = vmul.f32 %v723, %v714
    %v726 = vmul.f32 %v724, %v717
    %v727 = vadd.f32 %v714, %v725
    %v728 = vadd.f32 %v717, %v726
    %v729 = vmul.f32 %v727, 0.7978846
    %v730 = vmul.f32 %v728, 0.7978846
    %v731 = vtanh.pop %v729
    %v732 = vtanh.pop %v730
    %v733 = vadd.f32 %v731, 1.0
    %v734 = vadd.f32 %v732, 1.0
    %v735 = vmul.f32 %v719, %v733
    %v736 = vmul.f32 %v720, %v734
    %v737 = vld [vmem:[%s13] sm:$0xff]
    %v738 = vld [vmem:[%s13 + $0x8] sm:$0xff]
    %v739 = vld [vmem:[%s13 + $0x10] sm:$0xff]
    %v740 = vld [vmem:[%s13 + $0x18] sm:$0xff]
    %v741 = vld [vmem:[%s13 + $0x20] sm:$0xff]
    %v742 = vld [vmem:[%s13 + $0x28] sm:$0xff]
    %v743 = vld [vmem:[%s13 + $0x30] sm:$0xff]
    %v744 = vld [vmem:[%s13 + $0x38] sm:$0xff]
    %v745 = vld [vmem:[#allocation13] sm:$0x1]
    %v747 = vperm.slane %v745, 0
    %vm749 = vcmask 523264
    %v751 = vsel %vm749, %v735, 0
    %v754 = vsel %vm749, %v736, 0
    %756 = vmatpush.msra.mxu0 0.0
    %757 = vmatpush.msra.mxu0 0.0
    %758 = vmatpush.msra.mxu0 0.0
    %759 = vmatpush.msra.mxu0 0.0
    %760 = vmatpush.msra.mxu0 0.0
    %761 = vmatpush.msra.mxu0 0.0
    %762 = vmatpush.msra.mxu0 0.0
    %763 = vmatpush.msra.mxu0 0.0
    %764 = vmatpush.msra.mxu0 %v744
    %765 = vmatpush.msra.mxu0 %v743
    %766 = vmatpush.msra.mxu0 %v742
    %767 = vmatpush.msra.mxu0 %v741
    %768 = vmatpush.msra.mxu0 %v740
    %769 = vmatpush.msra.mxu0 %v739
    %770 = vmatpush.msra.mxu0 %v738
    %771 = vmatpush.msra.mxu0 %v737
    %772 = vmatmul.f32.gmra.mxu0 %v751
    %v773 = vpop.f32.mrf.mxu0
    %v774 = vadd.f32 %v747, %v773
    %775 = vmatmul.f32.gmra.mxu0 %v754
    %v776 = vpop.f32.mrf.mxu0
    %v777 = vadd.f32 %v747, %v776
    %778 = vdwg.mxu0
    %v779 = vadd.f32 %v680, %v774
    %v780 = vadd.f32 %v681, %v777
    %v781 = vld [vmem:[%s15] sm:$0x1]
    %v782 = vld [vmem:[#allocation14] sm:$0x1]
    %v783 = vsel %vm164, %v779, 0.0
    %784 = vadd.xlane.f32.xlu0 %v783
    %v785 = vpop.xlane.xlu0 %784
    %v786 = vsel %vm164, %v780, 0.0
    %787 = vadd.xlane.f32.xlu0 %v786
    %v788 = vpop.xlane.xlu0 %787
    %v789 = vmul.f32 %v785, %v177
    %v790 = vmul.f32 %v788, %v177
    %v791 = vsub.f32 %v779, %v789
    %v792 = vsub.f32 %v780, %v790
    %v793 = vmul.f32 %v791, %v791
    %v794 = vmul.f32 %v792, %v792
    %v795 = vsel %vm164, %v793, 0.0
    %796 = vadd.xlane.f32.xlu0 %v795
    %v797 = vpop.xlane.xlu0 %796
    %v798 = vsel %vm164, %v794, 0.0
    %799 = vadd.xlane.f32.xlu0 %v798
    %v800 = vpop.xlane.xlu0 %799
    %v801 = vmul.f32 %v797, %v177
    %v802 = vmul.f32 %v800, %v177
    %v803 = vadd.f32 %v801, 1e-12
    %v804 = vadd.f32 %v802, 1e-12
    %v805 = vrsqrt.pop %v803
    %v806 = vmul.f32 %v805, %v803
    %v807 = vmul.f32 %v806, %v805
    %v808 = vmul.f32 0.5, %v807
    %v809 = vsub.f32 1.5, %v808
    %v810 = vmul.f32 %v805, %v809
    %vm811 = vweird.f32 %v803
    %vm812 = vweird.f32 %v805
    %vm813 = vmor %vm811, %vm812
    %v814 = vsel %vm813, %v805, %v810
    %v815 = vrsqrt.pop %v804
    %v816 = vmul.f32 %v815, %v804
    %v817 = vmul.f32 %v816, %v815
    %v818 = vmul.f32 0.5, %v817
    %v819 = vsub.f32 1.5, %v818
    %v820 = vmul.f32 %v815, %v819
    %vm821 = vweird.f32 %v804
    %vm822 = vweird.f32 %v815
    %vm823 = vmor %vm821, %vm822
    %v824 = vsel %vm823, %v815, %v820
    %v825 = vmul.f32 %v791, %v814
    %v826 = vmul.f32 %v792, %v824
    %v828 = vperm.slane %v781, 0
    %v830 = vmul.f32 %v825, %v828
    %v831 = vmul.f32 %v826, %v828
    %v833 = vperm.slane %v782, 0
    %v835 = vadd.f32 %v830, %v833
    %v836 = vadd.f32 %v831, %v833
    %s837 = scalar_lea.vmem %s5, 32
    %v838 = vld [vmem:[%s837] sm:$0xff]
    %v839 = vld [vmem:[%s837 + $0x8] sm:$0xff]
    %v840 = vld [vmem:[%s837 + $0x10] sm:$0xff]
    %v841 = vld [vmem:[%s837 + $0x18] sm:$0xff]
    %s842 = scalar_lea.vmem %s6, 1
    %v843 = vld [vmem:[%s842] sm:$0x1]
    %v845 = vperm.slane %v843, 0
    %v848 = vsel %vm164, %v835, 0
    %v851 = vsel %vm164, %v836, 0
    %853 = vmatpush.msra.mxu0 0.0
    %854 = vmatpush.msra.mxu0 0.0
    %855 = vmatpush.msra.mxu0 0.0
    %856 = vmatpush.msra.mxu0 0.0
    %857 = vmatpush.msra.mxu0 0.0
    %858 = vmatpush.msra.mxu0 0.0
    %859 = vmatpush.msra.mxu0 0.0
    %860 = vmatpush.msra.mxu0 0.0
    %861 = vmatpush.msra.mxu0 0.0
    %862 = vmatpush.msra.mxu0 0.0
    %863 = vmatpush.msra.mxu0 0.0
    %864 = vmatpush.msra.mxu0 0.0
    %865 = vmatpush.msra.mxu0 %v841
    %866 = vmatpush.msra.mxu0 %v840
    %867 = vmatpush.msra.mxu0 %v839
    %868 = vmatpush.msra.mxu0 %v838
    %869 = vmatmul.f32.gmra.mxu0 %v848
    %v870 = vpop.f32.mrf.mxu0
    %v871 = vadd.f32 %v845, %v870
    %872 = vmatmul.f32.gmra.mxu0 %v851
    %v873 = vpop.f32.mrf.mxu0
    %v874 = vadd.f32 %v845, %v873
    %875 = vdwg.mxu0
    %877 = vrot.lane.b32.xlu0 %v871, 96
    %v878 = vpop.permute.xlu0 %877
    %v879 = vsel %vm267, %v871, 0
    %v881 = vsel %vm267, %v878, 0
    %883 = vmatpush.xpose.msra.mxu0 0.0
    %884 = vmatpush.xpose.msra.mxu0 0.0
    %885 = vmatpush.xpose.msra.mxu0 0.0
    %886 = vmatpush.xpose.msra.mxu0 0.0
    %887 = vmatpush.xpose.msra.mxu0 0.0
    %888 = vmatpush.xpose.msra.mxu0 0.0
    %889 = vmatpush.xpose.msra.mxu0 0.0
    %890 = vmatpush.xpose.msra.mxu0 0.0
    %891 = vmatpush.xpose.msra.mxu0 0.0
    %892 = vmatpush.xpose.msra.mxu0 0.0
    %893 = vmatpush.xpose.msra.mxu0 0.0
    %894 = vmatpush.xpose.msra.mxu0 0.0
    %895 = vmatpush.xpose.msra.mxu0 0.0
    %896 = vmatpush.xpose.msra.mxu0 0.0
    %897 = vmatpush.xpose.msra.mxu0 0.0
    %898 = vmatpush.xpose.msra.mxu0 %v881
    %899 = vmatmul.f32.gmra.mxu0 %v879
    %v900 = vpop.f32.mrf.mxu0
    %v901 = vadd.f32 %v263, %v900
    %902 = vdwg.mxu0
    %v903 = vsel %vm292, %v901, -inf
    %904 = vmax.xlane.f32.xlu0 %v903
    %v905 = vpop.xlane.xlu0 %904
    %v906 = vsub.f32 %v901, %v905
    %v907 = vmul.f32 %v906, 1.442695
    %v908 = vpow.pop %v907
    %v909 = vsel %vm292, %v908, 0.0
    %910 = vadd.xlane.f32.xlu0 %v909
    %v911 = vpop.xlane.xlu0 %910
    %v912 = vrcp.pop %v911
    %v913 = vmul.f32 %v911, %v912
    %v914 = vsub.f32 1.0, %v913
    %v915 = vmul.f32 %v912, %v914
    %v916 = vadd.f32 %v912, %v915
    %vm917 = vweird.f32 %v911
    %vm918 = vweird.f32 %v912
    %vm919 = vmor %vm917, %vm918
    %v920 = vsel %vm919, %v912, %v916
    %v921 = vand.u32 2147483647, %v911
    %vm922 = vcmp.eq.f32.partialorder %v921, 8.507059e+37
    %v923 = vand.u32 %v911, 2147483648
    %v924 = vor.u32 1.1754944e-38, %v923
    %v925 = vsel %vm922, %v924, %v920
    %v926 = vmul.f32 %v908, %v925
    %927 = vrot.lane.b32.xlu0 %v871, 64
    %v928 = vpop.permute.xlu0 %927
    %v931 = vsel %vm292, %v926, 0
    %933 = vmatpush.msra.mxu0 0.0
    %934 = vmatpush.msra.mxu0 0.0
    %935 = vmatpush.msra.mxu0 0.0
    %936 = vmatpush.msra.mxu0 0.0
    %937 = vmatpush.msra.mxu0 0.0
    %938 = vmatpush.msra.mxu0 0.0
    %939 = vmatpush.msra.mxu0 0.0
    %940 = vmatpush.msra.mxu0 0.0
    %941 = vmatpush.msra.mxu0 0.0
    %942 = vmatpush.msra.mxu0 0.0
    %943 = vmatpush.msra.mxu0 0.0
    %944 = vmatpush.msra.mxu0 0.0
    %945 = vmatpush.msra.mxu0 0.0
    %946 = vmatpush.msra.mxu0 0.0
    %947 = vmatpush.msra.mxu0 0.0
    %948 = vmatpush.msra.mxu0 %v928
    %949 = vmatmul.f32.gmra.mxu0 %v931
    %v950 = vpop.f32.mrf.mxu0
    %v951 = vadd.f32 0.0, %v950
    %952 = vdwg.mxu0
    %953 = vrot.lane.b32.xlu0 %v871, 112
    %v954 = vpop.permute.xlu0 %953
    %955 = vrot.lane.b32.xlu0 %v871, 80
    %v956 = vpop.permute.xlu0 %955
    %v957 = vsel %vm267, %v954, 0
    %v959 = vsel %vm267, %v956, 0
    %961 = vmatpush.xpose.msra.mxu0 0.0
    %962 = vmatpush.xpose.msra.mxu0 0.0
    %963 = vmatpush.xpose.msra.mxu0 0.0
    %964 = vmatpush.xpose.msra.mxu0 0.0
    %965 = vmatpush.xpose.msra.mxu0 0.0
    %966 = vmatpush.xpose.msra.mxu0 0.0
    %967 = vmatpush.xpose.msra.mxu0 0.0
    %968 = vmatpush.xpose.msra.mxu0 0.0
    %969 = vmatpush.xpose.msra.mxu0 0.0
    %970 = vmatpush.xpose.msra.mxu0 0.0
    %971 = vmatpush.xpose.msra.mxu0 0.0
    %972 = vmatpush.xpose.msra.mxu0 0.0
    %973 = vmatpush.xpose.msra.mxu0 0.0
    %974 = vmatpush.xpose.msra.mxu0 0.0
    %975 = vmatpush.xpose.msra.mxu0 0.0
    %976 = vmatpush.xpose.msra.mxu0 %v959
    %977 = vmatmul.f32.gmra.mxu0 %v957
    %v978 = vpop.f32.mrf.mxu0
    %v979 = vadd.f32 %v263, %v978
    %980 = vdwg.mxu0
    %v981 = vsel %vm292, %v979, -inf
    %982 = vmax.xlane.f32.xlu0 %v981
    %v983 = vpop.xlane.xlu0 %982
    %v984 = vsub.f32 %v979, %v983
    %v985 = vmul.f32 %v984, 1.442695
    %v986 = vpow.pop %v985
    %v987 = vsel %vm292, %v986, 0.0
    %988 = vadd.xlane.f32.xlu0 %v987
    %v989 = vpop.xlane.xlu0 %988
    %v990 = vrcp.pop %v989
    %v991 = vmul.f32 %v989, %v990
    %v992 = vsub.f32 1.0, %v991
    %v993 = vmul.f32 %v990, %v992
    %v994 = vadd.f32 %v990, %v993
    %vm995 = vweird.f32 %v989
    %vm996 = vweird.f32 %v990
    %vm997 = vmor %vm995, %vm996
    %v998 = vsel %vm997, %v990, %v994
    %v999 = vand.u32 2147483647, %v989
    %vm1000 = vcmp.eq.f32.partialorder %v999, 8.507059e+37
    %v1001 = vand.u32 %v989, 2147483648
    %v1002 = vor.u32 1.1754944e-38, %v1001
    %v1003 = vsel %vm1000, %v1002, %v998
    %v1004 = vmul.f32 %v986, %v1003
    %1005 = vrot.lane.b32.xlu0 %v871, 48
    %v1006 = vpop.permute.xlu0 %1005
    %v1009 = vsel %vm292, %v1004, 0
    %1011 = vmatpush.msra.mxu0 0.0
    %1012 = vmatpush.msra.mxu0 0.0
    %1013 = vmatpush.msra.mxu0 0.0
    %1014 = vmatpush.msra.mxu0 0.0
    %1015 = vmatpush.msra.mxu0 0.0
    %1016 = vmatpush.msra.mxu0 0.0
    %1017 = vmatpush.msra.mxu0 0.0
    %1018 = vmatpush.msra.mxu0 0.0
    %1019 = vmatpush.msra.mxu0 0.0
    %1020 = vmatpush.msra.mxu0 0.0
    %1021 = vmatpush.msra.mxu0 0.0
    %1022 = vmatpush.msra.mxu0 0.0
    %1023 = vmatpush.msra.mxu0 0.0
    %1024 = vmatpush.msra.mxu0 0.0
    %1025 = vmatpush.msra.mxu0 0.0
    %1026 = vmatpush.msra.mxu0 %v1006
    %1027 = vmatmul.f32.gmra.mxu0 %v1009
    %v1028 = vpop.f32.mrf.mxu0
    %v1029 = vadd.f32 0.0, %v1028
    %1030 = vdwg.mxu0
    %1032 = vrot.lane.b32.xlu0 %v1029, 16
    %v1033 = vpop.permute.xlu0 %1032
    %v1035 = vsel %vm267, %v951, %v1033
    %1037 = vrot.lane.b32.xlu0 %v874, 96
    %v1038 = vpop.permute.xlu0 %1037
    %v1039 = vsel %vm267, %v874, 0
    %v1041 = vsel %vm267, %v1038, 0
    %1043 = vmatpush.xpose.msra.mxu0 0.0
    %1044 = vmatpush.xpose.msra.mxu0 0.0
    %1045 = vmatpush.xpose.msra.mxu0 0.0
    %1046 = vmatpush.xpose.msra.mxu0 0.0
    %1047 = vmatpush.xpose.msra.mxu0 0.0
    %1048 = vmatpush.xpose.msra.mxu0 0.0
    %1049 = vmatpush.xpose.msra.mxu0 0.0
    %1050 = vmatpush.xpose.msra.mxu0 0.0
    %1051 = vmatpush.xpose.msra.mxu0 0.0
    %1052 = vmatpush.xpose.msra.mxu0 0.0
    %1053 = vmatpush.xpose.msra.mxu0 0.0
    %1054 = vmatpush.xpose.msra.mxu0 0.0
    %1055 = vmatpush.xpose.msra.mxu0 0.0
    %1056 = vmatpush.xpose.msra.mxu0 0.0
    %1057 = vmatpush.xpose.msra.mxu0 0.0
    %1058 = vmatpush.xpose.msra.mxu0 %v1041
    %1059 = vmatmul.f32.gmra.mxu0 %v1039
    %v1060 = vpop.f32.mrf.mxu0
    %v1061 = vadd.f32 %v426, %v1060
    %1062 = vdwg.mxu0
    %v1063 = vsel %vm292, %v1061, -inf
    %1064 = vmax.xlane.f32.xlu0 %v1063
    %v1065 = vpop.xlane.xlu0 %1064
    %v1066 = vsub.f32 %v1061, %v1065
    %v1067 = vmul.f32 %v1066, 1.442695
    %v1068 = vpow.pop %v1067
    %v1069 = vsel %vm292, %v1068, 0.0
    %1070 = vadd.xlane.f32.xlu0 %v1069
    %v1071 = vpop.xlane.xlu0 %1070
    %v1072 = vrcp.pop %v1071
    %v1073 = vmul.f32 %v1071, %v1072
    %v1074 = vsub.f32 1.0, %v1073
    %v1075 = vmul.f32 %v1072, %v1074
    %v1076 = vadd.f32 %v1072, %v1075
    %vm1077 = vweird.f32 %v1071
    %vm1078 = vweird.f32 %v1072
    %vm1079 = vmor %vm1077, %vm1078
    %v1080 = vsel %vm1079, %v1072, %v1076
    %v1081 = vand.u32 2147483647, %v1071
    %vm1082 = vcmp.eq.f32.partialorder %v1081, 8.507059e+37
    %v1083 = vand.u32 %v1071, 2147483648
    %v1084 = vor.u32 1.1754944e-38, %v1083
    %v1085 = vsel %vm1082, %v1084, %v1080
    %v1086 = vmul.f32 %v1068, %v1085
    %1087 = vrot.lane.b32.xlu0 %v874, 64
    %v1088 = vpop.permute.xlu0 %1087
    %v1091 = vsel %vm292, %v1086, 0
    %1093 = vmatpush.msra.mxu0 0.0
    %1094 = vmatpush.msra.mxu0 0.0
    %1095 = vmatpush.msra.mxu0 0.0
    %1096 = vmatpush.msra.mxu0 0.0
    %1097 = vmatpush.msra.mxu0 0.0
    %1098 = vmatpush.msra.mxu0 0.0
    %1099 = vmatpush.msra.mxu0 0.0
    %1100 = vmatpush.msra.mxu0 0.0
    %1101 = vmatpush.msra.mxu0 0.0
    %1102 = vmatpush.msra.mxu0 0.0
    %1103 = vmatpush.msra.mxu0 0.0
    %1104 = vmatpush.msra.mxu0 0.0
    %1105 = vmatpush.msra.mxu0 0.0
    %1106 = vmatpush.msra.mxu0 0.0
    %1107 = vmatpush.msra.mxu0 0.0
    %1108 = vmatpush.msra.mxu0 %v1088
    %1109 = vmatmul.f32.gmra.mxu0 %v1091
    %v1110 = vpop.f32.mrf.mxu0
    %v1111 = vadd.f32 0.0, %v1110
    %1112 = vdwg.mxu0
    %1113 = vrot.lane.b32.xlu0 %v874, 112
    %v1114 = vpop.permute.xlu0 %1113
    %1115 = vrot.lane.b32.xlu0 %v874, 80
    %v1116 = vpop.permute.xlu0 %1115
    %v1117 = vsel %vm267, %v1114, 0
    %v1119 = vsel %vm267, %v1116, 0
    %1121 = vmatpush.xpose.msra.mxu0 0.0
    %1122 = vmatpush.xpose.msra.mxu0 0.0
    %1123 = vmatpush.xpose.msra.mxu0 0.0
    %1124 = vmatpush.xpose.msra.mxu0 0.0
    %1125 = vmatpush.xpose.msra.mxu0 0.0
    %1126 = vmatpush.xpose.msra.mxu0 0.0
    %1127 = vmatpush.xpose.msra.mxu0 0.0
    %1128 = vmatpush.xpose.msra.mxu0 0.0
    %1129 = vmatpush.xpose.msra.mxu0 0.0
    %1130 = vmatpush.xpose.msra.mxu0 0.0
    %1131 = vmatpush.xpose.msra.mxu0 0.0
    %1132 = vmatpush.xpose.msra.mxu0 0.0
    %1133 = vmatpush.xpose.msra.mxu0 0.0
    %1134 = vmatpush.xpose.msra.mxu0 0.0
    %1135 = vmatpush.xpose.msra.mxu0 0.0
    %1136 = vmatpush.xpose.msra.mxu0 %v1119
    %1137 = vmatmul.f32.gmra.mxu0 %v1117
    %v1138 = vpop.f32.mrf.mxu0
    %v1139 = vadd.f32 %v426, %v1138
    %1140 = vdwg.mxu0
    %v1141 = vsel %vm292, %v1139, -inf
    %1142 = vmax.xlane.f32.xlu0 %v1141
    %v1143 = vpop.xlane.xlu0 %1142
    %v1144 = vsub.f32 %v1139, %v1143
    %v1145 = vmul.f32 %v1144, 1.442695
    %v1146 = vpow.pop %v1145
    %v1147 = vsel %vm292, %v1146, 0.0
    %1148 = vadd.xlane.f32.xlu0 %v1147
    %v1149 = vpop.xlane.xlu0 %1148
    %v1150 = vrcp.pop %v1149
    %v1151 = vmul.f32 %v1149, %v1150
    %v1152 = vsub.f32 1.0, %v1151
    %v1153 = vmul.f32 %v1150, %v1152
    %v1154 = vadd.f32 %v1150, %v1153
    %vm1155 = vweird.f32 %v1149
    %vm1156 = vweird.f32 %v1150
    %vm1157 = vmor %vm1155, %vm1156
    %v1158 = vsel %vm1157, %v1150, %v1154
    %v1159 = vand.u32 2147483647, %v1149
    %vm1160 = vcmp.eq.f32.partialorder %v1159, 8.507059e+37
    %v1161 = vand.u32 %v1149, 2147483648
    %v1162 = vor.u32 1.1754944e-38, %v1161
    %v1163 = vsel %vm1160, %v1162, %v1158
    %v1164 = vmul.f32 %v1146, %v1163
    %1165 = vrot.lane.b32.xlu0 %v874, 48
    %v1166 = vpop.permute.xlu0 %1165
    %v1169 = vsel %vm292, %v1164, 0
    %1171 = vmatpush.msra.mxu0 0.0
    %1172 = vmatpush.msra.mxu0 0.0
    %1173 = vmatpush.msra.mxu0 0.0
    %1174 = vmatpush.msra.mxu0 0.0
    %1175 = vmatpush.msra.mxu0 0.0
    %1176 = vmatpush.msra.mxu0 0.0
    %1177 = vmatpush.msra.mxu0 0.0
    %1178 = vmatpush.msra.mxu0 0.0
    %1179 = vmatpush.msra.mxu0 0.0
    %1180 = vmatpush.msra.mxu0 0.0
    %1181 = vmatpush.msra.mxu0 0.0
    %1182 = vmatpush.msra.mxu0 0.0
    %1183 = vmatpush.msra.mxu0 0.0
    %1184 = vmatpush.msra.mxu0 0.0
    %1185 = vmatpush.msra.mxu0 0.0
    %1186 = vmatpush.msra.mxu0 %v1166
    %1187 = vmatmul.f32.gmra.mxu0 %v1169
    %v1188 = vpop.f32.mrf.mxu0
    %v1189 = vadd.f32 0.0, %v1188
    %1190 = vdwg.mxu0
    %1192 = vrot.lane.b32.xlu0 %v1189, 16
    %v1193 = vpop.permute.xlu0 %1192
    %v1195 = vsel %vm267, %v1111, %v1193
    %s1196 = scalar_lea.vmem %s7, 32
    %v1197 = vld [vmem:[%s1196] sm:$0xff]
    %v1198 = vld [vmem:[%s1196 + $0x8] sm:$0xff]
    %v1199 = vld [vmem:[%s1196 + $0x10] sm:$0xff]
    %v1200 = vld [vmem:[%s1196 + $0x18] sm:$0xff]
    %s1201 = scalar_lea.vmem %s8, 1
    %v1202 = vld [vmem:[%s1201] sm:$0x1]
    %v1204 = vperm.slane %v1202, 0
    %v1207 = vsel %vm164, %v1035, 0
    %v1210 = vsel %vm164, %v1195, 0
    %1212 = vmatpush.msra.mxu0 0.0
    %1213 = vmatpush.msra.mxu0 0.0
    %1214 = vmatpush.msra.mxu0 0.0
    %1215 = vmatpush.msra.mxu0 0.0
    %1216 = vmatpush.msra.mxu0 0.0
    %1217 = vmatpush.msra.mxu0 0.0
    %1218 = vmatpush.msra.mxu0 0.0
    %1219 = vmatpush.msra.mxu0 0.0
    %1220 = vmatpush.msra.mxu0 0.0
    %1221 = vmatpush.msra.mxu0 0.0
    %1222 = vmatpush.msra.mxu0 0.0
    %1223 = vmatpush.msra.mxu0 0.0
    %1224 = vmatpush.msra.mxu0 %v1200
    %1225 = vmatpush.msra.mxu0 %v1199
    %1226 = vmatpush.msra.mxu0 %v1198
    %1227 = vmatpush.msra.mxu0 %v1197
    %1228 = vmatmul.f32.gmra.mxu0 %v1207
    %v1229 = vpop.f32.mrf.mxu0
    %v1230 = vadd.f32 %v1204, %v1229
    %1231 = vmatmul.f32.gmra.mxu0 %v1210
    %v1232 = vpop.f32.mrf.mxu0
    %v1233 = vadd.f32 %v1204, %v1232
    %1234 = vdwg.mxu0
    %v1235 = vadd.f32 %v835, %v1230
    %v1236 = vadd.f32 %v836, %v1233
    %s1237 = scalar_lea.vmem %s9, 1
    %v1238 = vld [vmem:[%s1237] sm:$0x1]
    %s1239 = scalar_lea.vmem %s10, 1
    %v1240 = vld [vmem:[%s1239] sm:$0x1]
    %v1241 = vsel %vm164, %v1235, 0.0
    %1242 = vadd.xlane.f32.xlu0 %v1241
    %v1243 = vpop.xlane.xlu0 %1242
    %v1244 = vsel %vm164, %v1236, 0.0
    %1245 = vadd.xlane.f32.xlu0 %v1244
    %v1246 = vpop.xlane.xlu0 %1245
    %v1247 = vmul.f32 %v1243, %v177
    %v1248 = vmul.f32 %v1246, %v177
    %v1249 = vsub.f32 %v1235, %v1247
    %v1250 = vsub.f32 %v1236, %v1248
    %v1251 = vmul.f32 %v1249, %v1249
    %v1252 = vmul.f32 %v1250, %v1250
    %v1253 = vsel %vm164, %v1251, 0.0
    %1254 = vadd.xlane.f32.xlu0 %v1253
    %v1255 = vpop.xlane.xlu0 %1254
    %v1256 = vsel %vm164, %v1252, 0.0
    %1257 = vadd.xlane.f32.xlu0 %v1256
    %v1258 = vpop.xlane.xlu0 %1257
    %v1259 = vmul.f32 %v1255, %v177
    %v1260 = vmul.f32 %v1258, %v177
    %v1261 = vadd.f32 %v1259, 1e-12
    %v1262 = vadd.f32 %v1260, 1e-12
    %v1263 = vrsqrt.pop %v1261
    %v1264 = vmul.f32 %v1263, %v1261
    %v1265 = vmul.f32 %v1264, %v1263
    %v1266 = vmul.f32 0.5, %v1265
    %v1267 = vsub.f32 1.5, %v1266
    %v1268 = vmul.f32 %v1263, %v1267
    %vm1269 = vweird.f32 %v1261
    %vm1270 = vweird.f32 %v1263
    %vm1271 = vmor %vm1269, %vm1270
    %v1272 = vsel %vm1271, %v1263, %v1268
    %v1273 = vrsqrt.pop %v1262
    %v1274 = vmul.f32 %v1273, %v1262
    %v1275 = vmul.f32 %v1274, %v1273
    %v1276 = vmul.f32 0.5, %v1275
    %v1277 = vsub.f32 1.5, %v1276
    %v1278 = vmul.f32 %v1273, %v1277
    %vm1279 = vweird.f32 %v1262
    %vm1280 = vweird.f32 %v1273
    %vm1281 = vmor %vm1279, %vm1280
    %v1282 = vsel %vm1281, %v1273, %v1278
    %v1283 = vmul.f32 %v1249, %v1272
    %v1284 = vmul.f32 %v1250, %v1282
    %v1286 = vperm.slane %v1238, 0
    %v1288 = vmul.f32 %v1283, %v1286
    %v1289 = vmul.f32 %v1284, %v1286
    %v1291 = vperm.slane %v1240, 0
    %v1293 = vadd.f32 %v1288, %v1291
    %v1294 = vadd.f32 %v1289, %v1291
    %s1295 = scalar_lea.vmem %s11, 32
    %v1296 = vld [vmem:[%s1295] sm:$0xff]
    %v1297 = vld [vmem:[%s1295 + $0x8] sm:$0xff]
    %v1298 = vld [vmem:[%s1295 + $0x10] sm:$0xff]
    %v1299 = vld [vmem:[%s1295 + $0x18] sm:$0xff]
    %s1300 = scalar_lea.vmem [#allocation11], 1
    %v1301 = vld [vmem:[%s1300] sm:$0x1]
    %v1303 = vperm.slane %v1301, 0
    %v1306 = vsel %vm164, %v1293, 0
    %v1309 = vsel %vm164, %v1294, 0
    %1311 = vmatpush.msra.mxu0 0.0
    %1312 = vmatpush.msra.mxu0 0.0
    %1313 = vmatpush.msra.mxu0 0.0
    %1314 = vmatpush.msra.mxu0 0.0
    %1315 = vmatpush.msra.mxu0 0.0
    %1316 = vmatpush.msra.mxu0 0.0
    %1317 = vmatpush.msra.mxu0 0.0
    %1318 = vmatpush.msra.mxu0 0.0
    %1319 = vmatpush.msra.mxu0 0.0
    %1320 = vmatpush.msra.mxu0 0.0
    %1321 = vmatpush.msra.mxu0 0.0
    %1322 = vmatpush.msra.mxu0 0.0
    %1323 = vmatpush.msra.mxu0 %v1299
    %1324 = vmatpush.msra.mxu0 %v1298
    %1325 = vmatpush.msra.mxu0 %v1297
    %1326 = vmatpush.msra.mxu0 %v1296
    %1327 = vmatmul.f32.gmra.mxu0 %v1306
    %v1328 = vpop.f32.mrf.mxu0
    %v1329 = vadd.f32 %v1303, %v1328
    %1330 = vmatmul.f32.gmra.mxu0 %v1309
    %v1331 = vpop.f32.mrf.mxu0
    %v1332 = vadd.f32 %v1303, %v1331
    %1333 = vdwg.mxu0
    %v1334 = vmul.f32 %v1329, 0.5
    %v1335 = vmul.f32 %v1332, 0.5
    %v1336 = vmul.f32 %v1329, 0.044715
    %v1337 = vmul.f32 %v1332, 0.044715
    %v1338 = vmul.f32 %v1336, %v1329
    %v1339 = vmul.f32 %v1337, %v1332
    %v1340 = vmul.f32 %v1338, %v1329
    %v1341 = vmul.f32 %v1339, %v1332
    %v1342 = vadd.f32 %v1329, %v1340
    %v1343 = vadd.f32 %v1332, %v1341
    %v1344 = vmul.f32 %v1342, 0.7978846
    %v1345 = vmul.f32 %v1343, 0.7978846
    %v1346 = vtanh.pop %v1344
    %v1347 = vtanh.pop %v1345
    %v1348 = vadd.f32 %v1346, 1.0
    %v1349 = vadd.f32 %v1347, 1.0
    %v1350 = vmul.f32 %v1334, %v1348
    %v1351 = vmul.f32 %v1335, %v1349
    %s1352 = scalar_lea.vmem %s13, 64
    %v1353 = vld [vmem:[%s1352] sm:$0xff]
    %v1354 = vld [vmem:[%s1352 + $0x8] sm:$0xff]
    %v1355 = vld [vmem:[%s1352 + $0x10] sm:$0xff]
    %v1356 = vld [vmem:[%s1352 + $0x18] sm:$0xff]
    %v1357 = vld [vmem:[%s1352 + $0x20] sm:$0xff]
    %v1358 = vld [vmem:[%s1352 + $0x28] sm:$0xff]
    %v1359 = vld [vmem:[%s1352 + $0x30] sm:$0xff]
    %v1360 = vld [vmem:[%s1352 + $0x38] sm:$0xff]
    %s1361 = scalar_lea.vmem [#allocation13], 1
    %v1362 = vld [vmem:[%s1361] sm:$0x1]
    %v1364 = vperm.slane %v1362, 0
    %v1367 = vsel %vm749, %v1350, 0
    %v1370 = vsel %vm749, %v1351, 0
    %1372 = vmatpush.msra.mxu0 0.0
    %1373 = vmatpush.msra.mxu0 0.0
    %1374 = vmatpush.msra.mxu0 0.0
    %1375 = vmatpush.msra.mxu0 0.0
    %1376 = vmatpush.msra.mxu0 0.0
    %1377 = vmatpush.msra.mxu0 0.0
    %1378 = vmatpush.msra.mxu0 0.0
    %1379 = vmatpush.msra.mxu0 0.0
    %1380 = vmatpush.msra.mxu0 %v1360
    %1381 = vmatpush.msra.mxu0 %v1359
    %1382 = vmatpush.msra.mxu0 %v1358
    %1383 = vmatpush.msra.mxu0 %v1357
    %1384 = vmatpush.msra.mxu0 %v1356
    %1385 = vmatpush.msra.mxu0 %v1355
    %1386 = vmatpush.msra.mxu0 %v1354
    %1387 = vmatpush.msra.mxu0 %v1353
    %1388 = vmatmul.f32.gmra.mxu0 %v1367
    %v1389 = vpop.f32.mrf.mxu0
    %v1390 = vadd.f32 %v1364, %v1389
    %1391 = vmatmul.f32.gmra.mxu0 %v1370
    %v1392 = vpop.f32.mrf.mxu0
    %v1393 = vadd.f32 %v1364, %v1392
    %1394 = vdwg.mxu0
    %v1395 = vadd.f32 %v1293, %v1390
    %v1396 = vadd.f32 %v1294, %v1393
    %s1397 = scalar_lea.vmem %s15, 1
    %v1398 = vld [vmem:[%s1397] sm:$0x1]
    %s1399 = scalar_lea.vmem [#allocation14], 1
    %v1400 = vld [vmem:[%s1399] sm:$0x1]
    %v1401 = vsel %vm164, %v1395, 0.0
    %1402 = vadd.xlane.f32.xlu0 %v1401
    %v1403 = vpop.xlane.xlu0 %1402
    %v1404 = vsel %vm164, %v1396, 0.0
    %1405 = vadd.xlane.f32.xlu0 %v1404
    %v1406 = vpop.xlane.xlu0 %1405
    %v1407 = vmul.f32 %v1403, %v177
    %v1408 = vmul.f32 %v1406, %v177
    %v1409 = vsub.f32 %v1395, %v1407
    %v1410 = vsub.f32 %v1396, %v1408
    %v1411 = vmul.f32 %v1409, %v1409
    %v1412 = vmul.f32 %v1410, %v1410
    %v1413 = vsel %vm164, %v1411, 0.0
    %1414 = vadd.xlane.f32.xlu0 %v1413
    %v1415 = vpop.xlane.xlu0 %1414
    %v1416 = vsel %vm164, %v1412, 0.0
    %1417 = vadd.xlane.f32.xlu0 %v1416
    %v1418 = vpop.xlane.xlu0 %1417
    %v1419 = vmul.f32 %v1415, %v177
    %v1420 = vmul.f32 %v1418, %v177
    %v1421 = vadd.f32 %v1419, 1e-12
    %v1422 = vadd.f32 %v1420, 1e-12
    %v1423 = vrsqrt.pop %v1421
    %v1424 = vmul.f32 %v1423, %v1421
    %v1425 = vmul.f32 %v1424, %v1423
    %v1426 = vmul.f32 0.5, %v1425
    %v1427 = vsub.f32 1.5, %v1426
    %v1428 = vmul.f32 %v1423, %v1427
    %vm1429 = vweird.f32 %v1421
    %vm1430 = vweird.f32 %v1423
    %vm1431 = vmor %vm1429, %vm1430
    %v1432 = vsel %vm1431, %v1423, %v1428
    %v1433 = vrsqrt.pop %v1422
    %v1434 = vmul.f32 %v1433, %v1422
    %v1435 = vmul.f32 %v1434, %v1433
    %v1436 = vmul.f32 0.5, %v1435
    %v1437 = vsub.f32 1.5, %v1436
    %v1438 = vmul.f32 %v1433, %v1437
    %vm1439 = vweird.f32 %v1422
    %vm1440 = vweird.f32 %v1433
    %vm1441 = vmor %vm1439, %vm1440
    %v1442 = vsel %vm1441, %v1433, %v1438
    %v1443 = vmul.f32 %v1409, %v1432
    %v1444 = vmul.f32 %v1410, %v1442
    %v1446 = vperm.slane %v1398, 0
    %v1448 = vmul.f32 %v1443, %v1446
    %v1449 = vmul.f32 %v1444, %v1446
    %v1451 = vperm.slane %v1400, 0
    %v1453 = vadd.f32 %v1448, %v1451
    %v1454 = vadd.f32 %v1449, %v1451
    %1455 = vst.msk [vmem:[#allocation2] sm:$0xff] %vm164, %v1453
    %1456 = vst.msk [vmem:[#allocation2 + $0x8] sm:$0xff] %vm164, %v1454
    %s1457 = sld [smem:[#allocation4]]
    %s1458 = sld [smem:[#allocation4 + $0x1]]
    %s1459 = scalar_lea.vmem [#allocation2], %s1457
    %v1460 = vld [vmem:[%s1459] sm:$0x1]
    %s1461 = scalar_lea.vmem [#allocation2], %s1458
    %v1462 = vld [vmem:[%s1461] sm:$0x1]
    %1464 = vrot.lane.b32.xlu0 %v1462, 32
    %v1465 = vpop.permute.xlu0 %1464
    %v1467 = vsel %vm164, %v1460, %v1465
    %s1468 = sld [smem:[#allocation4 + $0x80]]
    %s1469 = sld [smem:[#allocation4 + $0x81]]
    %s1470 = sadd.s32 %s1468, 8
    %s1471 = scalar_lea.vmem [#allocation2], %s1470
    %v1472 = vld [vmem:[%s1471] sm:$0x1]
    %s1473 = sadd.s32 %s1469, 8
    %s1474 = scalar_lea.vmem [#allocation2], %s1473
    %v1475 = vld [vmem:[%s1474] sm:$0x1]
    %1477 = vrot.lane.b32.xlu0 %v1475, 32
    %v1478 = vpop.permute.xlu0 %1477
    %v1480 = vsel %vm164, %v1472, %v1478
    %v1482 = vrot.slane %v1480, 7
    %vm1484 = vcmask 1040384
    %v1485 = vsel %vm1484, %v1467, %v1482
    %v1486 = vtanh.pop %v1485
    %v1487 = vld [vmem:[%s17] sm:$0xff]
    %v1488 = vld [vmem:[%s17 + $0x8] sm:$0xff]
    %v1489 = vld [vmem:[%s17 + $0x10] sm:$0xff]
    %v1490 = vld [vmem:[%s17 + $0x18] sm:$0xff]
    %v1491 = vld [vmem:[%s17 + $0x20] sm:$0xff]
    %v1492 = vld [vmem:[%s17 + $0x28] sm:$0xff]
    %v1493 = vld [vmem:[%s17 + $0x30] sm:$0xff]
    %v1494 = vld [vmem:[%s17 + $0x38] sm:$0xff]
    %v1495 = vld [vmem:[%s18] sm:$0x1]
    %v1497 = vperm.slane %v1495, 0
    %v1500 = vsel %vm749, %v1486, 0
    %1502 = vmatpush.msra.mxu0 0.0
    %1503 = vmatpush.msra.mxu0 0.0
    %1504 = vmatpush.msra.mxu0 0.0
    %1505 = vmatpush.msra.mxu0 0.0
    %1506 = vmatpush.msra.mxu0 0.0
    %1507 = vmatpush.msra.mxu0 0.0
    %1508 = vmatpush.msra.mxu0 0.0
    %1509 = vmatpush.msra.mxu0 0.0
    %1510 = vmatpush.msra.mxu0 %v1494
    %1511 = vmatpush.msra.mxu0 %v1493
    %1512 = vmatpush.msra.mxu0 %v1492
    %1513 = vmatpush.msra.mxu0 %v1491
    %1514 = vmatpush.msra.mxu0 %v1490
    %1515 = vmatpush.msra.mxu0 %v1489
    %1516 = vmatpush.msra.mxu0 %v1488
    %1517 = vmatpush.msra.mxu0 %v1487
    %1518 = vmatmul.f32.gmra.mxu0 %v1500
    %v1519 = vpop.f32.mrf.mxu0
    %v1520 = vadd.f32 %v1497, %v1519
    %1521 = vdwg.mxu0
    %vm1522 = vcmask 25600
    %v1523 = vsel %vm1522, %v1520, -inf
    %1524 = vmax.xlane.f32.xlu0 %v1523
    %v1525 = vpop.xlane.xlu0 %1524
    %v1526 = vsub.f32 %v1520, %v1525
    %v1527 = vmul.f32 %v1526, 1.442695
    %v1528 = vpow.pop %v1527
    %v1529 = vsel %vm1522, %v1528, 0.0
    %1530 = vadd.xlane.f32.xlu0 %v1529
    %v1531 = vpop.xlane.xlu0 %1530
    %v1532 = vlog2.pop %v1531
    %v1533 = vmul.f32 %v1532, 0.6931472
    %v1534 = vadd.f32 %v1525, %v1533
    %v1535 = vsub.f32 %v1520, %v1534
    %1536 = vst.msk [vmem:[#allocation16] sm:$0x3] %vm1522, %v1535
    // Predicated region
    $region98: #{tpu_custom_call.1} parent=1 // pred_check
      _
    $region99: #{tpu_custom_call.1} parent=1 // pred_check_branch
      %1538 = sbr.rel (0) target = $region101
    $region100: #{tpu_custom_call.1} parent=1 // pred_region
      %1540 = vsyncadd [#allocation7], 0
      %s1542 = sshll.u32 [#allocation16], 4
      %s1543 = int_to_ptr.vmem [resolvable:$true] %s1542
      %s1544 = sshll.u32 %s19, 4
      %s1545 = int_to_ptr.hbm [resolvable:$true] %s1544
      %1547 = dma.vmem_to_hbm [thread:$0]  %s1543, 32, %s1545, [#allocation7]
    $region101: #{tpu_custom_call.1} parent=1 // pred_fallthru
      _
    // Predicated region
    $region102: #{tpu_custom_call.1} parent=1 // pred_check
      _
    $region103: #{tpu_custom_call.1} parent=1 // pred_check_branch
      %1549 = sbr.rel (0) target = $region105
    $region104: #{tpu_custom_call.1} parent=1 // pred_region
      %1551 = dma.done [#allocation7], 32
    $region105: #{tpu_custom_call.1} parent=1 // pred_fallthru
      _
    %1552 = vsyncpa [#allocation6], 1
    %1553 = vsyncpa [#allocation9], 1
    %1554 = vsyncpa [#allocation12], 1
    %1555 = vsyncpa [#allocation15], 1
    %1556 = vsyncpa [#allocation7], 1

</llo_original>
